<compile_context>
chip_gen: v6e
topology: v6e:2x2x1
jax: 0.10.0
libtpu: 0.0.40
codegen_flags: <defaults>
</compile_context>

<pallas_src>
import functools

import jax
import jax.numpy as jnp
from jax.experimental import pallas as pl
from jax.experimental.pallas import tpu as pltpu


def _round_up(x: int, m: int) -> int:
    return ((x + m - 1) // m) * m


def _pad_to(a, shape):
    pads = [(0, s - d) for d, s in zip(a.shape, shape)]
    if all(p == (0, 0) for p in pads):
        return a
    return jnp.pad(a, pads)


def _mlp_backbone_kernel(x_ref, w1_ref, b1_ref, w2_ref, b2_ref, w3_ref, b3_ref,
                         o_ref):
    """Fused 3-layer MLP forward: out = relu(relu(x@W1+b1)@W2+b2)@W3+b3.

    Matmul inputs are bf16, accumulation is f32 (MXU), epilogue is f32 (VPU).
    """
    x = x_ref[...]                                               # bf16 (TB, D)
    h1 = jnp.dot(x, w1_ref[...], preferred_element_type=jnp.float32)
    h1 = jnp.maximum(h1 + b1_ref[...], 0.0)                      # f32 epilogue
    h2 = jnp.dot(h1.astype(jnp.bfloat16), w2_ref[...],
                 preferred_element_type=jnp.float32)
    h2 = jnp.maximum(h2 + b2_ref[...], 0.0)                      # f32 epilogue
    logits = jnp.dot(h2.astype(jnp.bfloat16), w3_ref[...],
                     preferred_element_type=jnp.float32)
    o_ref[...] = logits + b3_ref[...]                            # lane-dense f32 store


@functools.partial(jax.jit, static_argnames=("batch_tile",))
def continual_model_forward(x_nchw, params, *, batch_tile=128):
    """Equivalent of ContinualModel.forward(x) -> self.net(x) with MLP backbone."""
    w1, b1, w2, b2, w3, b3 = params
    B = x_nchw.shape[0]
    d_in = w1.shape[0]
    hidden = w1.shape[1]
    num_classes = w3.shape[1]

    x_flat = x_nchw.reshape(B, -1)        # row-major NCHW flatten (torch-compatible)
    assert x_flat.shape[1] == d_in

    # Lane/sublane-aligned padded sizes (zero padding is exact: padded input /
    # weight rows contribute 0, padded hidden/class columns stay 0 and are
    # sliced off at the end).
    d_pad = _round_up(d_in, 128)
    h_pad = _round_up(hidden, 128)
    c_pad = _round_up(num_classes, 128)
    tb = batch_tile
    b_pad = _round_up(max(B, tb), tb)

    # bf16 at the MXU inputs; f32 biases for the f32 epilogue.
    x_p = _pad_to(x_flat, (b_pad, d_pad)).astype(jnp.bfloat16)
    w1_p = _pad_to(w1, (d_pad, h_pad)).astype(jnp.bfloat16)
    w2_p = _pad_to(w2, (h_pad, h_pad)).astype(jnp.bfloat16)
    w3_p = _pad_to(w3, (h_pad, c_pad)).astype(jnp.bfloat16)
    b1_p = _pad_to(b1, (1, h_pad)).astype(jnp.float32)
    b2_p = _pad_to(b2, (1, h_pad)).astype(jnp.float32)
    b3_p = _pad_to(b3, (1, c_pad)).astype(jnp.float32)

    grid = (b_pad // tb,)

    flops = 2 * b_pad * (d_pad * h_pad + h_pad * h_pad + h_pad * c_pad)
    bytes_accessed = (
        b_pad * d_pad * 2                              # bf16 activations in
        + (d_pad * h_pad + h_pad * h_pad + h_pad * c_pad) * 2  # bf16 weights
        + (h_pad + h_pad + c_pad) * 4                  # f32 biases
        + b_pad * c_pad * 4                            # f32 logits out
    )

    out = pl.pallas_call(
        _mlp_backbone_kernel,
        out_shape=jax.ShapeDtypeStruct((b_pad, c_pad), jnp.float32),
        grid=grid,
        in_specs=[
            # Only the activation tile changes across grid steps.
            pl.BlockSpec((tb, d_pad), lambda i: (i, 0)),
            # Weights / biases: constant index_map -> stay resident in VMEM.
            pl.BlockSpec((d_pad, h_pad), lambda i: (0, 0)),
            pl.BlockSpec((1, h_pad), lambda i: (0, 0)),
            pl.BlockSpec((h_pad, h_pad), lambda i: (0, 0)),
            pl.BlockSpec((1, h_pad), lambda i: (0, 0)),
            pl.BlockSpec((h_pad, c_pad), lambda i: (0, 0)),
            pl.BlockSpec((1, c_pad), lambda i: (0, 0)),
        ],
        out_specs=pl.BlockSpec((tb, c_pad), lambda i: (i, 0)),
        compiler_params=pltpu.CompilerParams(
            dimension_semantics=("parallel",)),
        cost_estimate=pl.CostEstimate(
            flops=flops, transcendentals=0, bytes_accessed=bytes_accessed),
    )(x_p, w1_p, b1_p, w2_p, b2_p, w3_p, b3_p)

    return out[:B, :num_classes]


def init_params(key, d_in, hidden, num_classes):
    """Deterministic synthetic parameter init (no checkpoint loading)."""
    k1, k2, k3 = jax.random.split(key, 3)
    w1 = jax.random.normal(k1, (d_in, hidden), jnp.float32) * (1.0 / jnp.sqrt(d_in))
    b1 = jnp.zeros((1, hidden), jnp.float32)
    w2 = jax.random.normal(k2, (hidden, hidden), jnp.float32) * (1.0 / jnp.sqrt(hidden))
    b2 = jnp.zeros((1, hidden), jnp.float32)
    w3 = jax.random.normal(k3, (hidden, num_classes), jnp.float32) * (1.0 / jnp.sqrt(hidden))
    b3 = jnp.zeros((1, num_classes), jnp.float32)
    return (w1, b1, w2, b2, w3, b3)


if __name__ == "__main__":
    # Small shapes consistent with the module's image-batch forward.
    B, C, H, W = 2, 4, 16, 16
    hidden = 128
    num_classes = 10
    d_in = C * H * W

    key = jax.random.PRNGKey(0)
    kx, kp = jax.random.split(key)
    x = jax.random.normal(kx, (B, C, H, W), jnp.float32)
    params = init_params(kp, d_in, hidden, num_classes)

    out = continual_model_forward(x, params)
    out = jax.block_until_ready(out)
    assert out.shape == (B, num_classes)

    # Cross-check against a plain-JAX reference of the same bf16-matmul/f32-acc
    # backbone (tight), plus a loose sanity check against the pure-f32 path.
    w1, b1, w2, b2, w3, b3 = params
    xf = x.reshape(B, d_in)

    h1 = jnp.maximum(
        jnp.dot(xf.astype(jnp.bfloat16), w1.astype(jnp.bfloat16),
                preferred_element_type=jnp.float32) + b1, 0.0)
    h2 = jnp.maximum(
        jnp.dot(h1.astype(jnp.bfloat16), w2.astype(jnp.bfloat16),
                preferred_element_type=jnp.float32) + b2, 0.0)
    ref_bf16 = jnp.dot(h2.astype(jnp.bfloat16), w3.astype(jnp.bfloat16),
                       preferred_element_type=jnp.float32) + b3
    assert jnp.allclose(out, ref_bf16, atol=2e-2, rtol=2e-2)

    ref_f32 = jnp.maximum(xf @ w1 + b1, 0.0)
    ref_f32 = jnp.maximum(ref_f32 @ w2 + b2, 0.0)
    ref_f32 = ref_f32 @ w3 + b3
    assert jnp.allclose(out, ref_f32, atol=0.2, rtol=0.1)

    # TODO(synk): observe()/rotate()/optimizers (SGD/Adam, CosineAnnealingLR) and
    # torchvision buffer transforms are training/augmentation machinery with no
    # forward-pass Pallas equivalent; only forward() is implemented.
    print("KERNEL_OK")
</pallas_src>

<mosaic_0001>
module attributes {stable_mosaic.version = 11 : i64} {
  func.func @_mlp_backbone_kernel(%arg0: i32, %arg1: memref<128x1024xbf16, #tpu.memory_space<vmem>>, %arg2: memref<1024x128xbf16, #tpu.memory_space<vmem>>, %arg3: memref<1x128xf32, #tpu.memory_space<vmem>>, %arg4: memref<128x128xbf16, #tpu.memory_space<vmem>>, %arg5: memref<1x128xf32, #tpu.memory_space<vmem>>, %arg6: memref<128x128xbf16, #tpu.memory_space<vmem>>, %arg7: memref<1x128xf32, #tpu.memory_space<vmem>>, %arg8: memref<128x128xf32, #tpu.memory_space<vmem>>) attributes {dimension_semantics = [#tpu.dimension_semantics<parallel>], iteration_bounds = array<i64: 1>, scalar_prefetch = 0 : i64, scratch_operands = 0 : i64, tpu.core_type = #tpu.core_type<tc>, window_params = [{transform_indices = @transform_0, window_bounds = array<i64: 128, 1024>}, {pipeline_mode = #tpu.pipeline_mode<synchronous>, transform_indices = @transform_1, window_bounds = array<i64: 1024, 128>}, {pipeline_mode = #tpu.pipeline_mode<synchronous>, transform_indices = @transform_2, window_bounds = array<i64: 1, 128>}, {pipeline_mode = #tpu.pipeline_mode<synchronous>, transform_indices = @transform_3, window_bounds = array<i64: 128, 128>}, {pipeline_mode = #tpu.pipeline_mode<synchronous>, transform_indices = @transform_4, window_bounds = array<i64: 1, 128>}, {pipeline_mode = #tpu.pipeline_mode<synchronous>, transform_indices = @transform_5, window_bounds = array<i64: 128, 128>}, {pipeline_mode = #tpu.pipeline_mode<synchronous>, transform_indices = @transform_6, window_bounds = array<i64: 1, 128>}, {transform_indices = @transform_7, window_bounds = array<i64: 128, 128>}]} {
    %c0 = arith.constant 0 : index
    %c0_0 = arith.constant 0 : index
    %0 = vector.load %arg1[%c0, %c0_0] : memref<128x1024xbf16, #tpu.memory_space<vmem>>, vector<128x1024xbf16>
    %c0_1 = arith.constant 0 : index
    %c0_2 = arith.constant 0 : index
    %1 = vector.load %arg2[%c0_1, %c0_2] : memref<1024x128xbf16, #tpu.memory_space<vmem>>, vector<1024x128xbf16>
    %cst = arith.constant dense<0.000000e+00> : vector<128x128xf32>
    %2 = tpu.matmul %0, %1, %cst {dimension_numbers = #tpu.dot_dimension_numbers<[1], [0], [0], [1], [0, 0, 1, 1], [], []>} : vector<128x1024xbf16>, vector<1024x128xbf16>, vector<128x128xf32> -> vector<128x128xf32>
    %c0_3 = arith.constant 0 : index
    %c0_4 = arith.constant 0 : index
    %3 = vector.load %arg3[%c0_3, %c0_4] : memref<1x128xf32, #tpu.memory_space<vmem>>, vector<1x128xf32>
    %4 = vector.broadcast %3 : vector<1x128xf32> to vector<128x128xf32>
    %5 = arith.addf %2, %4 : vector<128x128xf32>
    %cst_5 = arith.constant 0.000000e+00 : f32
    %6 = vector.broadcast %cst_5 : f32 to vector<128x128xf32>
    %7 = arith.maximumf %5, %6 : vector<128x128xf32>
    %8 = arith.truncf %7 : vector<128x128xf32> to vector<128x128xbf16>
    %c0_6 = arith.constant 0 : index
    %c0_7 = arith.constant 0 : index
    %9 = vector.load %arg4[%c0_6, %c0_7] : memref<128x128xbf16, #tpu.memory_space<vmem>>, vector<128x128xbf16>
    %cst_8 = arith.constant dense<0.000000e+00> : vector<128x128xf32>
    %10 = tpu.matmul %8, %9, %cst_8 {dimension_numbers = #tpu.dot_dimension_numbers<[1], [0], [0], [1], [0, 0, 1, 1], [], []>} : vector<128x128xbf16>, vector<128x128xbf16>, vector<128x128xf32> -> vector<128x128xf32>
    %c0_9 = arith.constant 0 : index
    %c0_10 = arith.constant 0 : index
    %11 = vector.load %arg5[%c0_9, %c0_10] : memref<1x128xf32, #tpu.memory_space<vmem>>, vector<1x128xf32>
    %12 = vector.broadcast %11 : vector<1x128xf32> to vector<128x128xf32>
    %13 = arith.addf %10, %12 : vector<128x128xf32>
    %cst_11 = arith.constant 0.000000e+00 : f32
    %14 = vector.broadcast %cst_11 : f32 to vector<128x128xf32>
    %15 = arith.maximumf %13, %14 : vector<128x128xf32>
    %16 = arith.truncf %15 : vector<128x128xf32> to vector<128x128xbf16>
    %c0_12 = arith.constant 0 : index
    %c0_13 = arith.constant 0 : index
    %17 = vector.load %arg6[%c0_12, %c0_13] : memref<128x128xbf16, #tpu.memory_space<vmem>>, vector<128x128xbf16>
    %cst_14 = arith.constant dense<0.000000e+00> : vector<128x128xf32>
    %18 = tpu.matmul %16, %17, %cst_14 {dimension_numbers = #tpu.dot_dimension_numbers<[1], [0], [0], [1], [0, 0, 1, 1], [], []>} : vector<128x128xbf16>, vector<128x128xbf16>, vector<128x128xf32> -> vector<128x128xf32>
    %c0_15 = arith.constant 0 : index
    %c0_16 = arith.constant 0 : index
    %19 = vector.load %arg7[%c0_15, %c0_16] : memref<1x128xf32, #tpu.memory_space<vmem>>, vector<1x128xf32>
    %20 = vector.broadcast %19 : vector<1x128xf32> to vector<128x128xf32>
    %21 = arith.addf %18, %20 : vector<128x128xf32>
    %c0_17 = arith.constant 0 : index
    %c0_18 = arith.constant 0 : index
    %22 = vector.load %arg8[%c0_17, %c0_18] : memref<128x128xf32, #tpu.memory_space<vmem>>, vector<128x128xf32>
    tpu.vector_store %arg8[%c0_17, %c0_18], %21 {strides = array<i32>} : memref<128x128xf32, #tpu.memory_space<vmem>>, vector<128x128xf32>,
    return
  }
  func.func @transform_0(%arg0: i32) -> (i32, i32) {
    %c0_i32 = arith.constant 0 : i32
    %c0_i32_0 = arith.constant 0 : i32
    return %arg0, %c0_i32 : i32, i32
  }
  func.func @transform_1(%arg0: i32) -> (i32, i32) {
    %c0_i32 = arith.constant 0 : i32
    %c0_i32_0 = arith.constant 0 : i32
    %c0_i32_1 = arith.constant 0 : i32
    return %c0_i32, %c0_i32_0 : i32, i32
  }
  func.func @transform_2(%arg0: i32) -> (i32, i32) {
    %c0_i32 = arith.constant 0 : i32
    %c0_i32_0 = arith.constant 0 : i32
    %c0_i32_1 = arith.constant 0 : i32
    return %c0_i32, %c0_i32_0 : i32, i32
  }
  func.func @transform_3(%arg0: i32) -> (i32, i32) {
    %c0_i32 = arith.constant 0 : i32
    %c0_i32_0 = arith.constant 0 : i32
    %c0_i32_1 = arith.constant 0 : i32
    return %c0_i32, %c0_i32_0 : i32, i32
  }
  func.func @transform_4(%arg0: i32) -> (i32, i32) {
    %c0_i32 = arith.constant 0 : i32
    %c0_i32_0 = arith.constant 0 : i32
    %c0_i32_1 = arith.constant 0 : i32
    return %c0_i32, %c0_i32_0 : i32, i32
  }
  func.func @transform_5(%arg0: i32) -> (i32, i32) {
    %c0_i32 = arith.constant 0 : i32
    %c0_i32_0 = arith.constant 0 : i32
    %c0_i32_1 = arith.constant 0 : i32
    return %c0_i32, %c0_i32_0 : i32, i32
  }
  func.func @transform_6(%arg0: i32) -> (i32, i32) {
    %c0_i32 = arith.constant 0 : i32
    %c0_i32_0 = arith.constant 0 : i32
    %c0_i32_1 = arith.constant 0 : i32
    return %c0_i32, %c0_i32_0 : i32, i32
  }
  func.func @transform_7(%arg0: i32) -> (i32, i32) {
    %c0_i32 = arith.constant 0 : i32
    %c0_i32_0 = arith.constant 0 : i32
    return %arg0, %c0_i32 : i32, i32
  }
}

</mosaic_0001>

<llo_original>
// kernel: continual_model_forward.1
$region0: #{continual_model_forward.1}
  #allocation0 [shape = 'u32[]', space=smem, size = 0x4, offset = 0x4, fixed_abs, tag = 'smem constant byte address 0x4 - core index']
  #allocation1 [shape = 'u32[144,128]{1,0:T(1,128)}', space=vmem, size = 0x12000, scoped, tag = 'internal scratch']
  %s0 = inlined_call_operand.vmem [shape: bf16[128,1024], index: 0, kind: input, shape index: {}]
  %s1 = inlined_call_operand.vmem [shape: bf16[1024,128], index: 1, kind: input, shape index: {}]
  %s2 = inlined_call_operand.vmem [shape: f32[1,128], index: 2, kind: input, shape index: {}]
  %s3 = inlined_call_operand.vmem [shape: bf16[128,128], index: 3, kind: input, shape index: {}]
  %s4 = inlined_call_operand.vmem [shape: f32[1,128], index: 4, kind: input, shape index: {}]
  %s5 = inlined_call_operand.vmem [shape: bf16[128,128], index: 5, kind: input, shape index: {}]
  %s6 = inlined_call_operand.vmem [shape: f32[1,128], index: 6, kind: input, shape index: {}]
  %s7 = inlined_call_operand.vmem [shape: f32[128,128], index: 7, kind: output, shape index: {}]
  %s8 = sld [smem:[#allocation0]]
  $region38: #{continual_model_forward.1} parent=0
    _
  %s10 = ssub.s32 1, %s8
  %s11 = scalar_select 0, %s10, %s8
  // Predicated region
  $region2: #{continual_model_forward.1} parent=0 // pred_check
    _
  $region3: #{continual_model_forward.1} parent=0 // pred_check_branch
    %13 = sbr.rel (0) target = $region5
  $region4: #{continual_model_forward.1} parent=0 // pred_region
    _
  $region5: #{continual_model_forward.1} parent=0 // pred_fallthru
    _
  // Predicated region
  $region6: #{continual_model_forward.1} parent=0 // pred_check
    _
  $region7: #{continual_model_forward.1} parent=0 // pred_check_branch
    %15 = sbr.rel (0) target = $region9
  $region8: #{continual_model_forward.1} parent=0 // pred_region
    _
  $region9: #{continual_model_forward.1} parent=0 // pred_fallthru
    _
  // Predicated region
  $region10: #{continual_model_forward.1} parent=0 // pred_check
    _
  $region11: #{continual_model_forward.1} parent=0 // pred_check_branch
    %17 = sbr.rel (0) target = $region13
  $region12: #{continual_model_forward.1} parent=0 // pred_region
    _
  $region13: #{continual_model_forward.1} parent=0 // pred_fallthru
    _
  // Predicated region
  $region14: #{continual_model_forward.1} parent=0 // pred_check
    _
  $region15: #{continual_model_forward.1} parent=0 // pred_check_branch
    %19 = sbr.rel (0) target = $region17
  $region16: #{continual_model_forward.1} parent=0 // pred_region
    _
  $region17: #{continual_model_forward.1} parent=0 // pred_fallthru
    _
  // Predicated region
  $region18: #{continual_model_forward.1} parent=0 // pred_check
    _
  $region19: #{continual_model_forward.1} parent=0 // pred_check_branch
    %21 = sbr.rel (0) target = $region21
  $region20: #{continual_model_forward.1} parent=0 // pred_region
    _
  $region21: #{continual_model_forward.1} parent=0 // pred_fallthru
    _
  // Predicated region
  $region22: #{continual_model_forward.1} parent=0 // pred_check
    _
  $region23: #{continual_model_forward.1} parent=0 // pred_check_branch
    %23 = sbr.rel (0) target = $region25
  $region24: #{continual_model_forward.1} parent=0 // pred_region
    _
  $region25: #{continual_model_forward.1} parent=0 // pred_fallthru
    _
  // Predicated region
  $region26: #{continual_model_forward.1} parent=0 // pred_check
    _
  $region27: #{continual_model_forward.1} parent=0 // pred_check_branch
    %25 = sbr.rel (0) target = $region29
  $region28: #{continual_model_forward.1} parent=0 // pred_region
    _
  $region29: #{continual_model_forward.1} parent=0 // pred_fallthru
    _
  %v27 = vld [vmem:[%s0] sm:$0xff]
  %v28 = vld [vmem:[%s0 + $0x8] sm:$0xff]
  %v29 = vld [vmem:[%s0 + $0x10] sm:$0xff]
  %v30 = vld [vmem:[%s0 + $0x18] sm:$0xff]
  %v31 = vld [vmem:[%s0 + $0x20] sm:$0xff]
  %v32 = vld [vmem:[%s0 + $0x28] sm:$0xff]
  %v33 = vld [vmem:[%s0 + $0x30] sm:$0xff]
  %v34 = vld [vmem:[%s0 + $0x38] sm:$0xff]
  %v35 = vld [vmem:[%s0 + $0x40] sm:$0xff]
  %v36 = vld [vmem:[%s0 + $0x48] sm:$0xff]
  %v37 = vld [vmem:[%s0 + $0x50] sm:$0xff]
  %v38 = vld [vmem:[%s0 + $0x58] sm:$0xff]
  %v39 = vld [vmem:[%s0 + $0x60] sm:$0xff]
  %v40 = vld [vmem:[%s0 + $0x68] sm:$0xff]
  %v41 = vld [vmem:[%s0 + $0x70] sm:$0xff]
  %v42 = vld [vmem:[%s0 + $0x78] sm:$0xff]
  %v43 = vld [vmem:[%s0 + $0x80] sm:$0xff]
  %v44 = vld [vmem:[%s0 + $0x88] sm:$0xff]
  %v45 = vld [vmem:[%s0 + $0x90] sm:$0xff]
  %v46 = vld [vmem:[%s0 + $0x98] sm:$0xff]
  %v47 = vld [vmem:[%s0 + $0xa0] sm:$0xff]
  %v48 = vld [vmem:[%s0 + $0xa8] sm:$0xff]
  %v49 = vld [vmem:[%s0 + $0xb0] sm:$0xff]
  %v50 = vld [vmem:[%s0 + $0xb8] sm:$0xff]
  %v51 = vld [vmem:[%s0 + $0xc0] sm:$0xff]
  %v52 = vld [vmem:[%s0 + $0xc8] sm:$0xff]
  %v53 = vld [vmem:[%s0 + $0xd0] sm:$0xff]
  %v54 = vld [vmem:[%s0 + $0xd8] sm:$0xff]
  %v55 = vld [vmem:[%s0 + $0xe0] sm:$0xff]
  %v56 = vld [vmem:[%s0 + $0xe8] sm:$0xff]
  %v57 = vld [vmem:[%s0 + $0xf0] sm:$0xff]
  %v58 = vld [vmem:[%s0 + $0xf8] sm:$0xff]
  %v59 = vld [vmem:[%s0 + $0x100] sm:$0xff]
  %v60 = vld [vmem:[%s0 + $0x108] sm:$0xff]
  %v61 = vld [vmem:[%s0 + $0x110] sm:$0xff]
  %v62 = vld [vmem:[%s0 + $0x118] sm:$0xff]
  %v63 = vld [vmem:[%s0 + $0x120] sm:$0xff]
  %v64 = vld [vmem:[%s0 + $0x128] sm:$0xff]
  %v65 = vld [vmem:[%s0 + $0x130] sm:$0xff]
  %v66 = vld [vmem:[%s0 + $0x138] sm:$0xff]
  %v67 = vld [vmem:[%s0 + $0x140] sm:$0xff]
  %v68 = vld [vmem:[%s0 + $0x148] sm:$0xff]
  %v69 = vld [vmem:[%s0 + $0x150] sm:$0xff]
  %v70 = vld [vmem:[%s0 + $0x158] sm:$0xff]
  %v71 = vld [vmem:[%s0 + $0x160] sm:$0xff]
  %v72 = vld [vmem:[%s0 + $0x168] sm:$0xff]
  %v73 = vld [vmem:[%s0 + $0x170] sm:$0xff]
  %v74 = vld [vmem:[%s0 + $0x178] sm:$0xff]
  %v75 = vld [vmem:[%s0 + $0x180] sm:$0xff]
  %v76 = vld [vmem:[%s0 + $0x188] sm:$0xff]
  %v77 = vld [vmem:[%s0 + $0x190] sm:$0xff]
  %v78 = vld [vmem:[%s0 + $0x198] sm:$0xff]
  %v79 = vld [vmem:[%s0 + $0x1a0] sm:$0xff]
  %v80 = vld [vmem:[%s0 + $0x1a8] sm:$0xff]
  %v81 = vld [vmem:[%s0 + $0x1b0] sm:$0xff]
  %v82 = vld [vmem:[%s0 + $0x1b8] sm:$0xff]
  %v83 = vld [vmem:[%s0 + $0x1c0] sm:$0xff]
  %v84 = vld [vmem:[%s0 + $0x1c8] sm:$0xff]
  %v85 = vld [vmem:[%s0 + $0x1d0] sm:$0xff]
  %v86 = vld [vmem:[%s0 + $0x1d8] sm:$0xff]
  %v87 = vld [vmem:[%s0 + $0x1e0] sm:$0xff]
  %v88 = vld [vmem:[%s0 + $0x1e8] sm:$0xff]
  %v89 = vld [vmem:[%s0 + $0x1f0] sm:$0xff]
  %v90 = vld [vmem:[%s0 + $0x1f8] sm:$0xff]
  %v91 = vld [vmem:[%s1] sm:$0xf]
  %v92 = vld [vmem:[%s1 + $0x4] sm:$0xf]
  %v93 = vld [vmem:[%s1 + $0x8] sm:$0xf]
  %v94 = vld [vmem:[%s1 + $0xc] sm:$0xf]
  %v95 = vld [vmem:[%s1 + $0x10] sm:$0xf]
  %v96 = vld [vmem:[%s1 + $0x14] sm:$0xf]
  %v97 = vld [vmem:[%s1 + $0x18] sm:$0xf]
  %v98 = vld [vmem:[%s1 + $0x1c] sm:$0xf]
  %v99 = vld [vmem:[%s1 + $0x20] sm:$0xf]
  %v100 = vld [vmem:[%s1 + $0x24] sm:$0xf]
  %v101 = vld [vmem:[%s1 + $0x28] sm:$0xf]
  %v102 = vld [vmem:[%s1 + $0x2c] sm:$0xf]
  %v103 = vld [vmem:[%s1 + $0x30] sm:$0xf]
  %v104 = vld [vmem:[%s1 + $0x34] sm:$0xf]
  %v105 = vld [vmem:[%s1 + $0x38] sm:$0xf]
  %v106 = vld [vmem:[%s1 + $0x3c] sm:$0xf]
  %v107 = vld [vmem:[%s1 + $0x40] sm:$0xf]
  %v108 = vld [vmem:[%s1 + $0x44] sm:$0xf]
  %v109 = vld [vmem:[%s1 + $0x48] sm:$0xf]
  %v110 = vld [vmem:[%s1 + $0x4c] sm:$0xf]
  %v111 = vld [vmem:[%s1 + $0x50] sm:$0xf]
  %v112 = vld [vmem:[%s1 + $0x54] sm:$0xf]
  %v113 = vld [vmem:[%s1 + $0x58] sm:$0xf]
  %v114 = vld [vmem:[%s1 + $0x5c] sm:$0xf]
  %v115 = vld [vmem:[%s1 + $0x60] sm:$0xf]
  %v116 = vld [vmem:[%s1 + $0x64] sm:$0xf]
  %v117 = vld [vmem:[%s1 + $0x68] sm:$0xf]
  %v118 = vld [vmem:[%s1 + $0x6c] sm:$0xf]
  %v119 = vld [vmem:[%s1 + $0x70] sm:$0xf]
  %v120 = vld [vmem:[%s1 + $0x74] sm:$0xf]
  %v121 = vld [vmem:[%s1 + $0x78] sm:$0xf]
  %v122 = vld [vmem:[%s1 + $0x7c] sm:$0xf]
  %v123 = vld [vmem:[%s1 + $0x80] sm:$0xf]
  %v124 = vld [vmem:[%s1 + $0x84] sm:$0xf]
  %v125 = vld [vmem:[%s1 + $0x88] sm:$0xf]
  %v126 = vld [vmem:[%s1 + $0x8c] sm:$0xf]
  %v127 = vld [vmem:[%s1 + $0x90] sm:$0xf]
  %v128 = vld [vmem:[%s1 + $0x94] sm:$0xf]
  %v129 = vld [vmem:[%s1 + $0x98] sm:$0xf]
  %v130 = vld [vmem:[%s1 + $0x9c] sm:$0xf]
  %v131 = vld [vmem:[%s1 + $0xa0] sm:$0xf]
  %v132 = vld [vmem:[%s1 + $0xa4] sm:$0xf]
  %v133 = vld [vmem:[%s1 + $0xa8] sm:$0xf]
  %v134 = vld [vmem:[%s1 + $0xac] sm:$0xf]
  %v135 = vld [vmem:[%s1 + $0xb0] sm:$0xf]
  %v136 = vld [vmem:[%s1 + $0xb4] sm:$0xf]
  %v137 = vld [vmem:[%s1 + $0xb8] sm:$0xf]
  %v138 = vld [vmem:[%s1 + $0xbc] sm:$0xf]
  %v139 = vld [vmem:[%s1 + $0xc0] sm:$0xf]
  %v140 = vld [vmem:[%s1 + $0xc4] sm:$0xf]
  %v141 = vld [vmem:[%s1 + $0xc8] sm:$0xf]
  %v142 = vld [vmem:[%s1 + $0xcc] sm:$0xf]
  %v143 = vld [vmem:[%s1 + $0xd0] sm:$0xf]
  %v144 = vld [vmem:[%s1 + $0xd4] sm:$0xf]
  %v145 = vld [vmem:[%s1 + $0xd8] sm:$0xf]
  %v146 = vld [vmem:[%s1 + $0xdc] sm:$0xf]
  %v147 = vld [vmem:[%s1 + $0xe0] sm:$0xf]
  %v148 = vld [vmem:[%s1 + $0xe4] sm:$0xf]
  %v149 = vld [vmem:[%s1 + $0xe8] sm:$0xf]
  %v150 = vld [vmem:[%s1 + $0xec] sm:$0xf]
  %v151 = vld [vmem:[%s1 + $0xf0] sm:$0xf]
  %v152 = vld [vmem:[%s1 + $0xf4] sm:$0xf]
  %v153 = vld [vmem:[%s1 + $0xf8] sm:$0xf]
  %v154 = vld [vmem:[%s1 + $0xfc] sm:$0xf]
  %v155 = vld [vmem:[%s1 + $0x100] sm:$0xf]
  %v156 = vld [vmem:[%s1 + $0x104] sm:$0xf]
  %v157 = vld [vmem:[%s1 + $0x108] sm:$0xf]
  %v158 = vld [vmem:[%s1 + $0x10c] sm:$0xf]
  %v159 = vld [vmem:[%s1 + $0x110] sm:$0xf]
  %v160 = vld [vmem:[%s1 + $0x114] sm:$0xf]
  %v161 = vld [vmem:[%s1 + $0x118] sm:$0xf]
  %v162 = vld [vmem:[%s1 + $0x11c] sm:$0xf]
  %v163 = vld [vmem:[%s1 + $0x120] sm:$0xf]
  %v164 = vld [vmem:[%s1 + $0x124] sm:$0xf]
  %v165 = vld [vmem:[%s1 + $0x128] sm:$0xf]
  %v166 = vld [vmem:[%s1 + $0x12c] sm:$0xf]
  %v167 = vld [vmem:[%s1 + $0x130] sm:$0xf]
  %v168 = vld [vmem:[%s1 + $0x134] sm:$0xf]
  %v169 = vld [vmem:[%s1 + $0x138] sm:$0xf]
  %v170 = vld [vmem:[%s1 + $0x13c] sm:$0xf]
  %v171 = vld [vmem:[%s1 + $0x140] sm:$0xf]
  %v172 = vld [vmem:[%s1 + $0x144] sm:$0xf]
  %v173 = vld [vmem:[%s1 + $0x148] sm:$0xf]
  %v174 = vld [vmem:[%s1 + $0x14c] sm:$0xf]
  %v175 = vld [vmem:[%s1 + $0x150] sm:$0xf]
  %v176 = vld [vmem:[%s1 + $0x154] sm:$0xf]
  %v177 = vld [vmem:[%s1 + $0x158] sm:$0xf]
  %v178 = vld [vmem:[%s1 + $0x15c] sm:$0xf]
  %v179 = vld [vmem:[%s1 + $0x160] sm:$0xf]
  %v180 = vld [vmem:[%s1 + $0x164] sm:$0xf]
  %v181 = vld [vmem:[%s1 + $0x168] sm:$0xf]
  %v182 = vld [vmem:[%s1 + $0x16c] sm:$0xf]
  %v183 = vld [vmem:[%s1 + $0x170] sm:$0xf]
  %v184 = vld [vmem:[%s1 + $0x174] sm:$0xf]
  %v185 = vld [vmem:[%s1 + $0x178] sm:$0xf]
  %v186 = vld [vmem:[%s1 + $0x17c] sm:$0xf]
  %v187 = vld [vmem:[%s1 + $0x180] sm:$0xf]
  %v188 = vld [vmem:[%s1 + $0x184] sm:$0xf]
  %v189 = vld [vmem:[%s1 + $0x188] sm:$0xf]
  %v190 = vld [vmem:[%s1 + $0x18c] sm:$0xf]
  %v191 = vld [vmem:[%s1 + $0x190] sm:$0xf]
  %v192 = vld [vmem:[%s1 + $0x194] sm:$0xf]
  %v193 = vld [vmem:[%s1 + $0x198] sm:$0xf]
  %v194 = vld [vmem:[%s1 + $0x19c] sm:$0xf]
  %v195 = vld [vmem:[%s1 + $0x1a0] sm:$0xf]
  %v196 = vld [vmem:[%s1 + $0x1a4] sm:$0xf]
  %v197 = vld [vmem:[%s1 + $0x1a8] sm:$0xf]
  %v198 = vld [vmem:[%s1 + $0x1ac] sm:$0xf]
  %v199 = vld [vmem:[%s1 + $0x1b0] sm:$0xf]
  %v200 = vld [vmem:[%s1 + $0x1b4] sm:$0xf]
  %v201 = vld [vmem:[%s1 + $0x1b8] sm:$0xf]
  %v202 = vld [vmem:[%s1 + $0x1bc] sm:$0xf]
  %v203 = vld [vmem:[%s1 + $0x1c0] sm:$0xf]
  %v204 = vld [vmem:[%s1 + $0x1c4] sm:$0xf]
  %v205 = vld [vmem:[%s1 + $0x1c8] sm:$0xf]
  %v206 = vld [vmem:[%s1 + $0x1cc] sm:$0xf]
  %v207 = vld [vmem:[%s1 + $0x1d0] sm:$0xf]
  %v208 = vld [vmem:[%s1 + $0x1d4] sm:$0xf]
  %v209 = vld [vmem:[%s1 + $0x1d8] sm:$0xf]
  %v210 = vld [vmem:[%s1 + $0x1dc] sm:$0xf]
  %v211 = vld [vmem:[%s1 + $0x1e0] sm:$0xf]
  %v212 = vld [vmem:[%s1 + $0x1e4] sm:$0xf]
  %v213 = vld [vmem:[%s1 + $0x1e8] sm:$0xf]
  %v214 = vld [vmem:[%s1 + $0x1ec] sm:$0xf]
  %v215 = vld [vmem:[%s1 + $0x1f0] sm:$0xf]
  %v216 = vld [vmem:[%s1 + $0x1f4] sm:$0xf]
  %v217 = vld [vmem:[%s1 + $0x1f8] sm:$0xf]
  %v218 = vld [vmem:[%s1 + $0x1fc] sm:$0xf]
  %v219 = vld [vmem:[%s2] sm:$0x1]
  %v221 = vlaneseq
  %v222 = vshrl.u32 %v221, 7
  %v223 = vsub.s32 0, %v222
  %v224 = vrot.slane %v219, %v223
  %v290 = vunpack.c.l.b16 %v27
  %v291 = vunpack.c.h.b16 %v27
  %v292 = vunpack.c.l.b16 %v28
  %v293 = vunpack.c.h.b16 %v28
  %v294 = vunpack.c.l.b16 %v29
  %v295 = vunpack.c.h.b16 %v29
  %v296 = vunpack.c.l.b16 %v30
  %v297 = vunpack.c.h.b16 %v30
  %v298 = vunpack.c.l.b16 %v31
  %v299 = vunpack.c.h.b16 %v31
  %v300 = vunpack.c.l.b16 %v32
  %v301 = vunpack.c.h.b16 %v32
  %v302 = vunpack.c.l.b16 %v33
  %v303 = vunpack.c.h.b16 %v33
  %v304 = vunpack.c.l.b16 %v34
  %v305 = vunpack.c.h.b16 %v34
  %v306 = vunpack.c.l.b16 %v35
  %v307 = vunpack.c.h.b16 %v35
  %v308 = vunpack.c.l.b16 %v36
  %v309 = vunpack.c.h.b16 %v36
  %v310 = vunpack.c.l.b16 %v37
  %v311 = vunpack.c.h.b16 %v37
  %v312 = vunpack.c.l.b16 %v38
  %v313 = vunpack.c.h.b16 %v38
  %v314 = vunpack.c.l.b16 %v39
  %v315 = vunpack.c.h.b16 %v39
  %v316 = vunpack.c.l.b16 %v40
  %v317 = vunpack.c.h.b16 %v40
  %v318 = vunpack.c.l.b16 %v41
  %v319 = vunpack.c.h.b16 %v41
  %v320 = vunpack.c.l.b16 %v42
  %v321 = vunpack.c.h.b16 %v42
  %v322 = vunpack.c.l.b16 %v43
  %v323 = vunpack.c.h.b16 %v43
  %v324 = vunpack.c.l.b16 %v44
  %v325 = vunpack.c.h.b16 %v44
  %v326 = vunpack.c.l.b16 %v45
  %v327 = vunpack.c.h.b16 %v45
  %v328 = vunpack.c.l.b16 %v46
  %v329 = vunpack.c.h.b16 %v46
  %v330 = vunpack.c.l.b16 %v47
  %v331 = vunpack.c.h.b16 %v47
  %v332 = vunpack.c.l.b16 %v48
  %v333 = vunpack.c.h.b16 %v48
  %v334 = vunpack.c.l.b16 %v49
  %v335 = vunpack.c.h.b16 %v49
  %v336 = vunpack.c.l.b16 %v50
  %v337 = vunpack.c.h.b16 %v50
  %v338 = vunpack.c.l.b16 %v51
  %v339 = vunpack.c.h.b16 %v51
  %v340 = vunpack.c.l.b16 %v52
  %v341 = vunpack.c.h.b16 %v52
  %v342 = vunpack.c.l.b16 %v53
  %v343 = vunpack.c.h.b16 %v53
  %v344 = vunpack.c.l.b16 %v54
  %v345 = vunpack.c.h.b16 %v54
  %v346 = vunpack.c.l.b16 %v55
  %v347 = vunpack.c.h.b16 %v55
  %v348 = vunpack.c.l.b16 %v56
  %v349 = vunpack.c.h.b16 %v56
  %v350 = vunpack.c.l.b16 %v57
  %v351 = vunpack.c.h.b16 %v57
  %v352 = vunpack.c.l.b16 %v58
  %v353 = vunpack.c.h.b16 %v58
  %v354 = vunpack.c.l.b16 %v59
  %v355 = vunpack.c.h.b16 %v59
  %v356 = vunpack.c.l.b16 %v60
  %v357 = vunpack.c.h.b16 %v60
  %v358 = vunpack.c.l.b16 %v61
  %v359 = vunpack.c.h.b16 %v61
  %v360 = vunpack.c.l.b16 %v62
  %v361 = vunpack.c.h.b16 %v62
  %v362 = vunpack.c.l.b16 %v63
  %v363 = vunpack.c.h.b16 %v63
  %v364 = vunpack.c.l.b16 %v64
  %v365 = vunpack.c.h.b16 %v64
  %v366 = vunpack.c.l.b16 %v65
  %v367 = vunpack.c.h.b16 %v65
  %v368 = vunpack.c.l.b16 %v66
  %v369 = vunpack.c.h.b16 %v66
  %v370 = vunpack.c.l.b16 %v67
  %v371 = vunpack.c.h.b16 %v67
  %v372 = vunpack.c.l.b16 %v68
  %v373 = vunpack.c.h.b16 %v68
  %v374 = vunpack.c.l.b16 %v69
  %v375 = vunpack.c.h.b16 %v69
  %v376 = vunpack.c.l.b16 %v70
  %v377 = vunpack.c.h.b16 %v70
  %v378 = vunpack.c.l.b16 %v71
  %v379 = vunpack.c.h.b16 %v71
  %v380 = vunpack.c.l.b16 %v72
  %v381 = vunpack.c.h.b16 %v72
  %v382 = vunpack.c.l.b16 %v73
  %v383 = vunpack.c.h.b16 %v73
  %v384 = vunpack.c.l.b16 %v74
  %v385 = vunpack.c.h.b16 %v74
  %v386 = vunpack.c.l.b16 %v75
  %v387 = vunpack.c.h.b16 %v75
  %v388 = vunpack.c.l.b16 %v76
  %v389 = vunpack.c.h.b16 %v76
  %v390 = vunpack.c.l.b16 %v77
  %v391 = vunpack.c.h.b16 %v77
  %v392 = vunpack.c.l.b16 %v78
  %v393 = vunpack.c.h.b16 %v78
  %v394 = vunpack.c.l.b16 %v79
  %v395 = vunpack.c.h.b16 %v79
  %v396 = vunpack.c.l.b16 %v80
  %v397 = vunpack.c.h.b16 %v80
  %v398 = vunpack.c.l.b16 %v81
  %v399 = vunpack.c.h.b16 %v81
  %v400 = vunpack.c.l.b16 %v82
  %v401 = vunpack.c.h.b16 %v82
  %v402 = vunpack.c.l.b16 %v83
  %v403 = vunpack.c.h.b16 %v83
  %v404 = vunpack.c.l.b16 %v84
  %v405 = vunpack.c.h.b16 %v84
  %v406 = vunpack.c.l.b16 %v85
  %v407 = vunpack.c.h.b16 %v85
  %v408 = vunpack.c.l.b16 %v86
  %v409 = vunpack.c.h.b16 %v86
  %v410 = vunpack.c.l.b16 %v87
  %v411 = vunpack.c.h.b16 %v87
  %v412 = vunpack.c.l.b16 %v88
  %v413 = vunpack.c.h.b16 %v88
  %v414 = vunpack.c.l.b16 %v89
  %v415 = vunpack.c.h.b16 %v89
  %v416 = vunpack.c.l.b16 %v90
  %v417 = vunpack.c.h.b16 %v90
  %v418 = vpack.c.b16 %v298, %v290
  %v419 = vpack.c.b16 %v299, %v291
  %v420 = vpack.c.b16 %v300, %v292
  %v421 = vpack.c.b16 %v301, %v293
  %v422 = vpack.c.b16 %v302, %v294
  %v423 = vpack.c.b16 %v303, %v295
  %v424 = vpack.c.b16 %v304, %v296
  %v425 = vpack.c.b16 %v305, %v297
  %v426 = vpack.c.b16 %v314, %v306
  %v427 = vpack.c.b16 %v315, %v307
  %v428 = vpack.c.b16 %v316, %v308
  %v429 = vpack.c.b16 %v317, %v309
  %v430 = vpack.c.b16 %v318, %v310
  %v431 = vpack.c.b16 %v319, %v311
  %v432 = vpack.c.b16 %v320, %v312
  %v433 = vpack.c.b16 %v321, %v313
  %v434 = vpack.c.b16 %v330, %v322
  %v435 = vpack.c.b16 %v331, %v323
  %v436 = vpack.c.b16 %v332, %v324
  %v437 = vpack.c.b16 %v333, %v325
  %v438 = vpack.c.b16 %v334, %v326
  %v439 = vpack.c.b16 %v335, %v327
  %v440 = vpack.c.b16 %v336, %v328
  %v441 = vpack.c.b16 %v337, %v329
  %v442 = vpack.c.b16 %v346, %v338
  %v443 = vpack.c.b16 %v347, %v339
  %v444 = vpack.c.b16 %v348, %v340
  %v445 = vpack.c.b16 %v349, %v341
  %v446 = vpack.c.b16 %v350, %v342
  %v447 = vpack.c.b16 %v351, %v343
  %v448 = vpack.c.b16 %v352, %v344
  %v449 = vpack.c.b16 %v353, %v345
  %v450 = vpack.c.b16 %v362, %v354
  %v451 = vpack.c.b16 %v363, %v355
  %v452 = vpack.c.b16 %v364, %v356
  %v453 = vpack.c.b16 %v365, %v357
  %v454 = vpack.c.b16 %v366, %v358
  %v455 = vpack.c.b16 %v367, %v359
  %v456 = vpack.c.b16 %v368, %v360
  %v457 = vpack.c.b16 %v369, %v361
  %v458 = vpack.c.b16 %v378, %v370
  %v459 = vpack.c.b16 %v379, %v371
  %v460 = vpack.c.b16 %v380, %v372
  %v461 = vpack.c.b16 %v381, %v373
  %v462 = vpack.c.b16 %v382, %v374
  %v463 = vpack.c.b16 %v383, %v375
  %v464 = vpack.c.b16 %v384, %v376
  %v465 = vpack.c.b16 %v385, %v377
  %v466 = vpack.c.b16 %v394, %v386
  %v467 = vpack.c.b16 %v395, %v387
  %v468 = vpack.c.b16 %v396, %v388
  %v469 = vpack.c.b16 %v397, %v389
  %v470 = vpack.c.b16 %v398, %v390
  %v471 = vpack.c.b16 %v399, %v391
  %v472 = vpack.c.b16 %v400, %v392
  %v473 = vpack.c.b16 %v401, %v393
  %v474 = vpack.c.b16 %v410, %v402
  %v475 = vpack.c.b16 %v411, %v403
  %v476 = vpack.c.b16 %v412, %v404
  %v477 = vpack.c.b16 %v413, %v405
  %v478 = vpack.c.b16 %v414, %v406
  %v479 = vpack.c.b16 %v415, %v407
  %v480 = vpack.c.b16 %v416, %v408
  %v481 = vpack.c.b16 %v417, %v409
  %v674 = vunpack.c.l.b16 %v91
  %v675 = vunpack.c.l.b16 %v92
  %v676 = vunpack.c.l.b16 %v93
  %v677 = vunpack.c.l.b16 %v94
  %v678 = vunpack.c.l.b16 %v95
  %v679 = vunpack.c.l.b16 %v96
  %v680 = vunpack.c.l.b16 %v97
  %v681 = vunpack.c.l.b16 %v98
  %v682 = vunpack.c.l.b16 %v99
  %v683 = vunpack.c.l.b16 %v100
  %v684 = vunpack.c.l.b16 %v101
  %v685 = vunpack.c.l.b16 %v102
  %v686 = vunpack.c.l.b16 %v103
  %v687 = vunpack.c.l.b16 %v104
  %v688 = vunpack.c.l.b16 %v105
  %v689 = vunpack.c.l.b16 %v106
  %v690 = vunpack.c.l.b16 %v107
  %v691 = vunpack.c.l.b16 %v108
  %v692 = vunpack.c.l.b16 %v109
  %v693 = vunpack.c.l.b16 %v110
  %v694 = vunpack.c.l.b16 %v111
  %v695 = vunpack.c.l.b16 %v112
  %v696 = vunpack.c.l.b16 %v113
  %v697 = vunpack.c.l.b16 %v114
  %v698 = vunpack.c.l.b16 %v115
  %v699 = vunpack.c.l.b16 %v116
  %v700 = vunpack.c.l.b16 %v117
  %v701 = vunpack.c.l.b16 %v118
  %v702 = vunpack.c.l.b16 %v119
  %v703 = vunpack.c.l.b16 %v120
  %v704 = vunpack.c.l.b16 %v121
  %v705 = vunpack.c.l.b16 %v122
  %v706 = vunpack.c.l.b16 %v123
  %v707 = vunpack.c.l.b16 %v124
  %v708 = vunpack.c.l.b16 %v125
  %v709 = vunpack.c.l.b16 %v126
  %v710 = vunpack.c.l.b16 %v127
  %v711 = vunpack.c.l.b16 %v128
  %v712 = vunpack.c.l.b16 %v129
  %v713 = vunpack.c.l.b16 %v130
  %v714 = vunpack.c.l.b16 %v131
  %v715 = vunpack.c.l.b16 %v132
  %v716 = vunpack.c.l.b16 %v133
  %v717 = vunpack.c.l.b16 %v134
  %v718 = vunpack.c.l.b16 %v135
  %v719 = vunpack.c.l.b16 %v136
  %v720 = vunpack.c.l.b16 %v137
  %v721 = vunpack.c.l.b16 %v138
  %v722 = vunpack.c.l.b16 %v139
  %v723 = vunpack.c.l.b16 %v140
  %v724 = vunpack.c.l.b16 %v141
  %v725 = vunpack.c.l.b16 %v142
  %v726 = vunpack.c.l.b16 %v143
  %v727 = vunpack.c.l.b16 %v144
  %v728 = vunpack.c.l.b16 %v145
  %v729 = vunpack.c.l.b16 %v146
  %v730 = vunpack.c.l.b16 %v147
  %v731 = vunpack.c.l.b16 %v148
  %v732 = vunpack.c.l.b16 %v149
  %v733 = vunpack.c.l.b16 %v150
  %v734 = vunpack.c.l.b16 %v151
  %v735 = vunpack.c.l.b16 %v152
  %v736 = vunpack.c.l.b16 %v153
  %v737 = vunpack.c.l.b16 %v154
  %v738 = vunpack.c.l.b16 %v155
  %v739 = vunpack.c.l.b16 %v156
  %v740 = vunpack.c.l.b16 %v157
  %v741 = vunpack.c.l.b16 %v158
  %v742 = vunpack.c.l.b16 %v159
  %v743 = vunpack.c.l.b16 %v160
  %v744 = vunpack.c.l.b16 %v161
  %v745 = vunpack.c.l.b16 %v162
  %v746 = vunpack.c.l.b16 %v163
  %v747 = vunpack.c.l.b16 %v164
  %v748 = vunpack.c.l.b16 %v165
  %v749 = vunpack.c.l.b16 %v166
  %v750 = vunpack.c.l.b16 %v167
  %v751 = vunpack.c.l.b16 %v168
  %v752 = vunpack.c.l.b16 %v169
  %v753 = vunpack.c.l.b16 %v170
  %v754 = vunpack.c.l.b16 %v171
  %v755 = vunpack.c.l.b16 %v172
  %v756 = vunpack.c.l.b16 %v173
  %v757 = vunpack.c.l.b16 %v174
  %v758 = vunpack.c.l.b16 %v175
  %v759 = vunpack.c.l.b16 %v176
  %v760 = vunpack.c.l.b16 %v177
  %v761 = vunpack.c.l.b16 %v178
  %v762 = vunpack.c.l.b16 %v179
  %v763 = vunpack.c.l.b16 %v180
  %v764 = vunpack.c.l.b16 %v181
  %v765 = vunpack.c.l.b16 %v182
  %v766 = vunpack.c.l.b16 %v183
  %v767 = vunpack.c.l.b16 %v184
  %v768 = vunpack.c.l.b16 %v185
  %v769 = vunpack.c.l.b16 %v186
  %v770 = vunpack.c.l.b16 %v187
  %v771 = vunpack.c.l.b16 %v188
  %v772 = vunpack.c.l.b16 %v189
  %v773 = vunpack.c.l.b16 %v190
  %v774 = vunpack.c.l.b16 %v191
  %v775 = vunpack.c.l.b16 %v192
  %v776 = vunpack.c.l.b16 %v193
  %v777 = vunpack.c.l.b16 %v194
  %v778 = vunpack.c.l.b16 %v195
  %v779 = vunpack.c.l.b16 %v196
  %v780 = vunpack.c.l.b16 %v197
  %v781 = vunpack.c.l.b16 %v198
  %v782 = vunpack.c.l.b16 %v199
  %v783 = vunpack.c.l.b16 %v200
  %v784 = vunpack.c.l.b16 %v201
  %v785 = vunpack.c.l.b16 %v202
  %v786 = vunpack.c.l.b16 %v203
  %v787 = vunpack.c.l.b16 %v204
  %v788 = vunpack.c.l.b16 %v205
  %v789 = vunpack.c.l.b16 %v206
  %v790 = vunpack.c.l.b16 %v207
  %v791 = vunpack.c.l.b16 %v208
  %v792 = vunpack.c.l.b16 %v209
  %v793 = vunpack.c.l.b16 %v210
  %v794 = vunpack.c.l.b16 %v211
  %v795 = vunpack.c.l.b16 %v212
  %v796 = vunpack.c.l.b16 %v213
  %v797 = vunpack.c.l.b16 %v214
  %v798 = vunpack.c.l.b16 %v215
  %v799 = vunpack.c.l.b16 %v216
  %v800 = vunpack.c.l.b16 %v217
  %v801 = vunpack.c.l.b16 %v218
  %v802 = vpack.c.b16 %v675, %v674
  %v803 = vpack.c.b16 %v677, %v676
  %v804 = vpack.c.b16 %v679, %v678
  %v805 = vpack.c.b16 %v681, %v680
  %v806 = vpack.c.b16 %v683, %v682
  %v807 = vpack.c.b16 %v685, %v684
  %v808 = vpack.c.b16 %v687, %v686
  %v809 = vpack.c.b16 %v689, %v688
  %v810 = vpack.c.b16 %v691, %v690
  %v811 = vpack.c.b16 %v693, %v692
  %v812 = vpack.c.b16 %v695, %v694
  %v813 = vpack.c.b16 %v697, %v696
  %v814 = vpack.c.b16 %v699, %v698
  %v815 = vpack.c.b16 %v701, %v700
  %v816 = vpack.c.b16 %v703, %v702
  %v817 = vpack.c.b16 %v705, %v704
  %v818 = vpack.c.b16 %v707, %v706
  %v819 = vpack.c.b16 %v709, %v708
  %v820 = vpack.c.b16 %v711, %v710
  %v821 = vpack.c.b16 %v713, %v712
  %v822 = vpack.c.b16 %v715, %v714
  %v823 = vpack.c.b16 %v717, %v716
  %v824 = vpack.c.b16 %v719, %v718
  %v825 = vpack.c.b16 %v721, %v720
  %v826 = vpack.c.b16 %v723, %v722
  %v827 = vpack.c.b16 %v725, %v724
  %v828 = vpack.c.b16 %v727, %v726
  %v829 = vpack.c.b16 %v729, %v728
  %v830 = vpack.c.b16 %v731, %v730
  %v831 = vpack.c.b16 %v733, %v732
  %v832 = vpack.c.b16 %v735, %v734
  %v833 = vpack.c.b16 %v737, %v736
  %v834 = vpack.c.b16 %v739, %v738
  %v835 = vpack.c.b16 %v741, %v740
  %v836 = vpack.c.b16 %v743, %v742
  %v837 = vpack.c.b16 %v745, %v744
  %v838 = vpack.c.b16 %v747, %v746
  %v839 = vpack.c.b16 %v749, %v748
  %v840 = vpack.c.b16 %v751, %v750
  %v841 = vpack.c.b16 %v753, %v752
  %v842 = vpack.c.b16 %v755, %v754
  %v843 = vpack.c.b16 %v757, %v756
  %v844 = vpack.c.b16 %v759, %v758
  %v845 = vpack.c.b16 %v761, %v760
  %v846 = vpack.c.b16 %v763, %v762
  %v847 = vpack.c.b16 %v765, %v764
  %v848 = vpack.c.b16 %v767, %v766
  %v849 = vpack.c.b16 %v769, %v768
  %v850 = vpack.c.b16 %v771, %v770
  %v851 = vpack.c.b16 %v773, %v772
  %v852 = vpack.c.b16 %v775, %v774
  %v853 = vpack.c.b16 %v777, %v776
  %v854 = vpack.c.b16 %v779, %v778
  %v855 = vpack.c.b16 %v781, %v780
  %v856 = vpack.c.b16 %v783, %v782
  %v857 = vpack.c.b16 %v785, %v784
  %v858 = vpack.c.b16 %v787, %v786
  %v859 = vpack.c.b16 %v789, %v788
  %v860 = vpack.c.b16 %v791, %v790
  %v861 = vpack.c.b16 %v793, %v792
  %v862 = vpack.c.b16 %v795, %v794
  %v863 = vpack.c.b16 %v797, %v796
  %v864 = vpack.c.b16 %v799, %v798
  %v865 = vpack.c.b16 %v801, %v800
  %930 = vmatprep.subr.bf16.mxu0 0
  %931 = vmatpush1.bf16.msra.mxu0 %v809
  %932 = vmatprep.subr.bf16.mxu0 0
  %933 = vmatpush1.bf16.msra.mxu0 %v808
  %934 = vmatprep.subr.bf16.mxu0 0
  %935 = vmatpush1.bf16.msra.mxu0 %v807
  %936 = vmatprep.subr.bf16.mxu0 0
  %937 = vmatpush1.bf16.msra.mxu0 %v806
  %938 = vmatprep.subr.bf16.mxu0 0
  %939 = vmatpush1.bf16.msra.mxu0 %v805
  %940 = vmatprep.subr.bf16.mxu0 0
  %941 = vmatpush1.bf16.msra.mxu0 %v804
  %942 = vmatprep.subr.bf16.mxu0 0
  %943 = vmatpush1.bf16.msra.mxu0 %v803
  %944 = vmatprep.subr.bf16.mxu0 0
  %945 = vmatpush1.bf16.msra.mxu0 %v802
  %946 = vmatprep.subr.bf16.mxu0 0
  %947 = vmatpush2.bf16.msra.mxu0 %v817
  %948 = vmatprep.subr.bf16.mxu0 0
  %949 = vmatpush2.bf16.msra.mxu0 %v816
  %950 = vmatprep.subr.bf16.mxu0 0
  %951 = vmatpush2.bf16.msra.mxu0 %v815
  %952 = vmatprep.subr.bf16.mxu0 0
  %953 = vmatpush2.bf16.msra.mxu0 %v814
  %954 = vmatprep.subr.bf16.mxu0 0
  %955 = vmatpush2.bf16.msra.mxu0 %v813
  %956 = vmatprep.subr.bf16.mxu0 0
  %957 = vmatpush2.bf16.msra.mxu0 %v812
  %958 = vmatprep.subr.bf16.mxu0 0
  %959 = vmatpush2.bf16.msra.mxu0 %v811
  %960 = vmatprep.subr.bf16.mxu0 0
  %961 = vmatpush2.bf16.msra.mxu0 %v810
  %962 = vmatprep.mubr.bf16.mxu0 %v419
  %963 = vmatmul.mubr.bf16.gmra.mxu0 %v418
  %v964 = vpop.f32.mrf.mxu0
  %v965 = vadd.f32 %v224, %v964
  %v966 = vpop.f32.mrf.mxu0
  %v967 = vpop.f32.mrf.mxu0
  %v968 = vadd.f32 %v224, %v967
  %v969 = vpop.f32.mrf.mxu0
  %970 = vmatprep.mubr.bf16.mxu0 %v427
  %971 = vmatmul.mubr.bf16.gmra.mxu0 %v426
  %v972 = vpop.f32.mrf.mxu0
  %v973 = vadd.f32 %v224, %v972
  %v974 = vpop.f32.mrf.mxu0
  %v975 = vpop.f32.mrf.mxu0
  %v976 = vadd.f32 %v224, %v975
  %v977 = vpop.f32.mrf.mxu0
  %978 = vmatprep.mubr.bf16.mxu0 %v435
  %979 = vmatmul.mubr.bf16.gmra.mxu0 %v434
  %v980 = vpop.f32.mrf.mxu0
  %v981 = vadd.f32 %v224, %v980
  %v982 = vpop.f32.mrf.mxu0
  %v983 = vpop.f32.mrf.mxu0
  %v984 = vadd.f32 %v224, %v983
  %v985 = vpop.f32.mrf.mxu0
  %986 = vmatprep.mubr.bf16.mxu0 %v443
  %987 = vmatmul.mubr.bf16.gmra.mxu0 %v442
  %v988 = vpop.f32.mrf.mxu0
  %v989 = vadd.f32 %v224, %v988
  %v990 = vpop.f32.mrf.mxu0
  %v991 = vpop.f32.mrf.mxu0
  %v992 = vadd.f32 %v224, %v991
  %v993 = vpop.f32.mrf.mxu0
  %994 = vmatprep.mubr.bf16.mxu0 %v451
  %995 = vmatmul.mubr.bf16.gmra.mxu0 %v450
  %v996 = vpop.f32.mrf.mxu0
  %v997 = vadd.f32 %v224, %v996
  %v998 = vpop.f32.mrf.mxu0
  %v999 = vpop.f32.mrf.mxu0
  %v1000 = vadd.f32 %v224, %v999
  %v1001 = vpop.f32.mrf.mxu0
  %1002 = vmatprep.mubr.bf16.mxu0 %v459
  %1003 = vmatmul.mubr.bf16.gmra.mxu0 %v458
  %v1004 = vpop.f32.mrf.mxu0
  %v1005 = vadd.f32 %v224, %v1004
  %v1006 = vpop.f32.mrf.mxu0
  %v1007 = vpop.f32.mrf.mxu0
  %v1008 = vadd.f32 %v224, %v1007
  %v1009 = vpop.f32.mrf.mxu0
  %1010 = vmatprep.mubr.bf16.mxu0 %v467
  %1011 = vmatmul.mubr.bf16.gmra.mxu0 %v466
  %v1012 = vpop.f32.mrf.mxu0
  %v1013 = vadd.f32 %v224, %v1012
  %v1014 = vpop.f32.mrf.mxu0
  %v1015 = vpop.f32.mrf.mxu0
  %v1016 = vadd.f32 %v224, %v1015
  %v1017 = vpop.f32.mrf.mxu0
  %1018 = vmatprep.mubr.bf16.mxu0 %v475
  %1019 = vmatmul.mubr.bf16.gmra.mxu0 %v474
  %v1020 = vpop.f32.mrf.mxu0
  %v1021 = vadd.f32 %v224, %v1020
  %v1022 = vpop.f32.mrf.mxu0
  %v1023 = vpop.f32.mrf.mxu0
  %v1024 = vadd.f32 %v224, %v1023
  %v1025 = vpop.f32.mrf.mxu0
  %1026 = vdwg.mxu0
  %1027 = vmatprep.subr.bf16.mxu0 0
  %1028 = vmatpush1.bf16.msra.mxu0 %v825
  %1029 = vmatprep.subr.bf16.mxu0 0
  %1030 = vmatpush1.bf16.msra.mxu0 %v824
  %1031 = vmatprep.subr.bf16.mxu0 0
  %1032 = vmatpush1.bf16.msra.mxu0 %v823
  %1033 = vmatprep.subr.bf16.mxu0 0
  %1034 = vmatpush1.bf16.msra.mxu0 %v822
  %1035 = vmatprep.subr.bf16.mxu0 0
  %1036 = vmatpush1.bf16.msra.mxu0 %v821
  %1037 = vmatprep.subr.bf16.mxu0 0
  %1038 = vmatpush1.bf16.msra.mxu0 %v820
  %1039 = vmatprep.subr.bf16.mxu0 0
  %1040 = vmatpush1.bf16.msra.mxu0 %v819
  %1041 = vmatprep.subr.bf16.mxu0 0
  %1042 = vmatpush1.bf16.msra.mxu0 %v818
  %1043 = vmatprep.subr.bf16.mxu0 0
  %1044 = vmatpush2.bf16.msra.mxu0 %v833
  %1045 = vmatprep.subr.bf16.mxu0 0
  %1046 = vmatpush2.bf16.msra.mxu0 %v832
  %1047 = vmatprep.subr.bf16.mxu0 0
  %1048 = vmatpush2.bf16.msra.mxu0 %v831
  %1049 = vmatprep.subr.bf16.mxu0 0
  %1050 = vmatpush2.bf16.msra.mxu0 %v830
  %1051 = vmatprep.subr.bf16.mxu0 0
  %1052 = vmatpush2.bf16.msra.mxu0 %v829
  %1053 = vmatprep.subr.bf16.mxu0 0
  %1054 = vmatpush2.bf16.msra.mxu0 %v828
  %1055 = vmatprep.subr.bf16.mxu0 0
  %1056 = vmatpush2.bf16.msra.mxu0 %v827
  %1057 = vmatprep.subr.bf16.mxu0 0
  %1058 = vmatpush2.bf16.msra.mxu0 %v826
  %1059 = vmatprep.mubr.bf16.mxu0 %v421
  %1060 = vmatmul.mubr.bf16.gmra.mxu0 %v420
  %v1061 = vpop.f32.mrf.mxu0
  %v1062 = vadd.f32 %v965, %v1061
  %v1063 = vpop.f32.mrf.mxu0
  %v1064 = vpop.f32.mrf.mxu0
  %v1065 = vadd.f32 %v968, %v1064
  %v1066 = vpop.f32.mrf.mxu0
  %1067 = vmatprep.mubr.bf16.mxu0 %v429
  %1068 = vmatmul.mubr.bf16.gmra.mxu0 %v428
  %v1069 = vpop.f32.mrf.mxu0
  %v1070 = vadd.f32 %v973, %v1069
  %v1071 = vpop.f32.mrf.mxu0
  %v1072 = vpop.f32.mrf.mxu0
  %v1073 = vadd.f32 %v976, %v1072
  %v1074 = vpop.f32.mrf.mxu0
  %1075 = vmatprep.mubr.bf16.mxu0 %v437
  %1076 = vmatmul.mubr.bf16.gmra.mxu0 %v436
  %v1077 = vpop.f32.mrf.mxu0
  %v1078 = vadd.f32 %v981, %v1077
  %v1079 = vpop.f32.mrf.mxu0
  %v1080 = vpop.f32.mrf.mxu0
  %v1081 = vadd.f32 %v984, %v1080
  %v1082 = vpop.f32.mrf.mxu0
  %1083 = vmatprep.mubr.bf16.mxu0 %v445
  %1084 = vmatmul.mubr.bf16.gmra.mxu0 %v444
  %v1085 = vpop.f32.mrf.mxu0
  %v1086 = vadd.f32 %v989, %v1085
  %v1087 = vpop.f32.mrf.mxu0
  %v1088 = vpop.f32.mrf.mxu0
  %v1089 = vadd.f32 %v992, %v1088
  %v1090 = vpop.f32.mrf.mxu0
  %1091 = vmatprep.mubr.bf16.mxu0 %v453
  %1092 = vmatmul.mubr.bf16.gmra.mxu0 %v452
  %v1093 = vpop.f32.mrf.mxu0
  %v1094 = vadd.f32 %v997, %v1093
  %v1095 = vpop.f32.mrf.mxu0
  %v1096 = vpop.f32.mrf.mxu0
  %v1097 = vadd.f32 %v1000, %v1096
  %v1098 = vpop.f32.mrf.mxu0
  %1099 = vmatprep.mubr.bf16.mxu0 %v461
  %1100 = vmatmul.mubr.bf16.gmra.mxu0 %v460
  %v1101 = vpop.f32.mrf.mxu0
  %v1102 = vadd.f32 %v1005, %v1101
  %v1103 = vpop.f32.mrf.mxu0
  %v1104 = vpop.f32.mrf.mxu0
  %v1105 = vadd.f32 %v1008, %v1104
  %v1106 = vpop.f32.mrf.mxu0
  %1107 = vmatprep.mubr.bf16.mxu0 %v469
  %1108 = vmatmul.mubr.bf16.gmra.mxu0 %v468
  %v1109 = vpop.f32.mrf.mxu0
  %v1110 = vadd.f32 %v1013, %v1109
  %v1111 = vpop.f32.mrf.mxu0
  %v1112 = vpop.f32.mrf.mxu0
  %v1113 = vadd.f32 %v1016, %v1112
  %v1114 = vpop.f32.mrf.mxu0
  %1115 = vmatprep.mubr.bf16.mxu0 %v477
  %1116 = vmatmul.mubr.bf16.gmra.mxu0 %v476
  %v1117 = vpop.f32.mrf.mxu0
  %v1118 = vadd.f32 %v1021, %v1117
  %v1119 = vpop.f32.mrf.mxu0
  %v1120 = vpop.f32.mrf.mxu0
  %v1121 = vadd.f32 %v1024, %v1120
  %v1122 = vpop.f32.mrf.mxu0
  %1123 = vdwg.mxu0
  %1124 = vmatprep.subr.bf16.mxu0 0
  %1125 = vmatpush1.bf16.msra.mxu0 %v841
  %1126 = vmatprep.subr.bf16.mxu0 0
  %1127 = vmatpush1.bf16.msra.mxu0 %v840
  %1128 = vmatprep.subr.bf16.mxu0 0
  %1129 = vmatpush1.bf16.msra.mxu0 %v839
  %1130 = vmatprep.subr.bf16.mxu0 0
  %1131 = vmatpush1.bf16.msra.mxu0 %v838
  %1132 = vmatprep.subr.bf16.mxu0 0
  %1133 = vmatpush1.bf16.msra.mxu0 %v837
  %1134 = vmatprep.subr.bf16.mxu0 0
  %1135 = vmatpush1.bf16.msra.mxu0 %v836
  %1136 = vmatprep.subr.bf16.mxu0 0
  %1137 = vmatpush1.bf16.msra.mxu0 %v835
  %1138 = vmatprep.subr.bf16.mxu0 0
  %1139 = vmatpush1.bf16.msra.mxu0 %v834
  %1140 = vmatprep.subr.bf16.mxu0 0
  %1141 = vmatpush2.bf16.msra.mxu0 %v849
  %1142 = vmatprep.subr.bf16.mxu0 0
  %1143 = vmatpush2.bf16.msra.mxu0 %v848
  %1144 = vmatprep.subr.bf16.mxu0 0
  %1145 = vmatpush2.bf16.msra.mxu0 %v847
  %1146 = vmatprep.subr.bf16.mxu0 0
  %1147 = vmatpush2.bf16.msra.mxu0 %v846
  %1148 = vmatprep.subr.bf16.mxu0 0
  %1149 = vmatpush2.bf16.msra.mxu0 %v845
  %1150 = vmatprep.subr.bf16.mxu0 0
  %1151 = vmatpush2.bf16.msra.mxu0 %v844
  %1152 = vmatprep.subr.bf16.mxu0 0
  %1153 = vmatpush2.bf16.msra.mxu0 %v843
  %1154 = vmatprep.subr.bf16.mxu0 0
  %1155 = vmatpush2.bf16.msra.mxu0 %v842
  %1156 = vmatprep.mubr.bf16.mxu0 %v423
  %1157 = vmatmul.mubr.bf16.gmra.mxu0 %v422
  %v1158 = vpop.f32.mrf.mxu0
  %v1159 = vadd.f32 %v1062, %v1158
  %v1160 = vpop.f32.mrf.mxu0
  %v1161 = vpop.f32.mrf.mxu0
  %v1162 = vadd.f32 %v1065, %v1161
  %v1163 = vpop.f32.mrf.mxu0
  %1164 = vmatprep.mubr.bf16.mxu0 %v431
  %1165 = vmatmul.mubr.bf16.gmra.mxu0 %v430
  %v1166 = vpop.f32.mrf.mxu0
  %v1167 = vadd.f32 %v1070, %v1166
  %v1168 = vpop.f32.mrf.mxu0
  %v1169 = vpop.f32.mrf.mxu0
  %v1170 = vadd.f32 %v1073, %v1169
  %v1171 = vpop.f32.mrf.mxu0
  %1172 = vmatprep.mubr.bf16.mxu0 %v439
  %1173 = vmatmul.mubr.bf16.gmra.mxu0 %v438
  %v1174 = vpop.f32.mrf.mxu0
  %v1175 = vadd.f32 %v1078, %v1174
  %v1176 = vpop.f32.mrf.mxu0
  %v1177 = vpop.f32.mrf.mxu0
  %v1178 = vadd.f32 %v1081, %v1177
  %v1179 = vpop.f32.mrf.mxu0
  %1180 = vmatprep.mubr.bf16.mxu0 %v447
  %1181 = vmatmul.mubr.bf16.gmra.mxu0 %v446
  %v1182 = vpop.f32.mrf.mxu0
  %v1183 = vadd.f32 %v1086, %v1182
  %v1184 = vpop.f32.mrf.mxu0
  %v1185 = vpop.f32.mrf.mxu0
  %v1186 = vadd.f32 %v1089, %v1185
  %v1187 = vpop.f32.mrf.mxu0
  %1188 = vmatprep.mubr.bf16.mxu0 %v455
  %1189 = vmatmul.mubr.bf16.gmra.mxu0 %v454
  %v1190 = vpop.f32.mrf.mxu0
  %v1191 = vadd.f32 %v1094, %v1190
  %v1192 = vpop.f32.mrf.mxu0
  %v1193 = vpop.f32.mrf.mxu0
  %v1194 = vadd.f32 %v1097, %v1193
  %v1195 = vpop.f32.mrf.mxu0
  %1196 = vmatprep.mubr.bf16.mxu0 %v463
  %1197 = vmatmul.mubr.bf16.gmra.mxu0 %v462
  %v1198 = vpop.f32.mrf.mxu0
  %v1199 = vadd.f32 %v1102, %v1198
  %v1200 = vpop.f32.mrf.mxu0
  %v1201 = vpop.f32.mrf.mxu0
  %v1202 = vadd.f32 %v1105, %v1201
  %v1203 = vpop.f32.mrf.mxu0
  %1204 = vmatprep.mubr.bf16.mxu0 %v471
  %1205 = vmatmul.mubr.bf16.gmra.mxu0 %v470
  %v1206 = vpop.f32.mrf.mxu0
  %v1207 = vadd.f32 %v1110, %v1206
  %v1208 = vpop.f32.mrf.mxu0
  %v1209 = vpop.f32.mrf.mxu0
  %v1210 = vadd.f32 %v1113, %v1209
  %v1211 = vpop.f32.mrf.mxu0
  %1212 = vmatprep.mubr.bf16.mxu0 %v479
  %1213 = vmatmul.mubr.bf16.gmra.mxu0 %v478
  %v1214 = vpop.f32.mrf.mxu0
  %v1215 = vadd.f32 %v1118, %v1214
  %v1216 = vpop.f32.mrf.mxu0
  %v1217 = vpop.f32.mrf.mxu0
  %v1218 = vadd.f32 %v1121, %v1217
  %v1219 = vpop.f32.mrf.mxu0
  %1220 = vdwg.mxu0
  %1221 = vmatprep.subr.bf16.mxu0 0
  %1222 = vmatpush1.bf16.msra.mxu0 %v857
  %1223 = vmatprep.subr.bf16.mxu0 0
  %1224 = vmatpush1.bf16.msra.mxu0 %v856
  %1225 = vmatprep.subr.bf16.mxu0 0
  %1226 = vmatpush1.bf16.msra.mxu0 %v855
  %1227 = vmatprep.subr.bf16.mxu0 0
  %1228 = vmatpush1.bf16.msra.mxu0 %v854
  %1229 = vmatprep.subr.bf16.mxu0 0
  %1230 = vmatpush1.bf16.msra.mxu0 %v853
  %1231 = vmatprep.subr.bf16.mxu0 0
  %1232 = vmatpush1.bf16.msra.mxu0 %v852
  %1233 = vmatprep.subr.bf16.mxu0 0
  %1234 = vmatpush1.bf16.msra.mxu0 %v851
  %1235 = vmatprep.subr.bf16.mxu0 0
  %1236 = vmatpush1.bf16.msra.mxu0 %v850
  %1237 = vmatprep.subr.bf16.mxu0 0
  %1238 = vmatpush2.bf16.msra.mxu0 %v865
  %1239 = vmatprep.subr.bf16.mxu0 0
  %1240 = vmatpush2.bf16.msra.mxu0 %v864
  %1241 = vmatprep.subr.bf16.mxu0 0
  %1242 = vmatpush2.bf16.msra.mxu0 %v863
  %1243 = vmatprep.subr.bf16.mxu0 0
  %1244 = vmatpush2.bf16.msra.mxu0 %v862
  %1245 = vmatprep.subr.bf16.mxu0 0
  %1246 = vmatpush2.bf16.msra.mxu0 %v861
  %1247 = vmatprep.subr.bf16.mxu0 0
  %1248 = vmatpush2.bf16.msra.mxu0 %v860
  %1249 = vmatprep.subr.bf16.mxu0 0
  %1250 = vmatpush2.bf16.msra.mxu0 %v859
  %1251 = vmatprep.subr.bf16.mxu0 0
  %1252 = vmatpush2.bf16.msra.mxu0 %v858
  %1253 = vmatprep.mubr.bf16.mxu0 %v425
  %1254 = vmatmul.mubr.bf16.gmra.mxu0 %v424
  %v1255 = vpop.f32.mrf.mxu0
  %v1256 = vadd.f32 %v1159, %v1255
  %v1257 = vpop.f32.mrf.mxu0
  %v1258 = vpop.f32.mrf.mxu0
  %v1259 = vadd.f32 %v1162, %v1258
  %v1260 = vpop.f32.mrf.mxu0
  %1261 = vmatprep.mubr.bf16.mxu0 %v433
  %1262 = vmatmul.mubr.bf16.gmra.mxu0 %v432
  %v1263 = vpop.f32.mrf.mxu0
  %v1264 = vadd.f32 %v1167, %v1263
  %v1265 = vpop.f32.mrf.mxu0
  %v1266 = vpop.f32.mrf.mxu0
  %v1267 = vadd.f32 %v1170, %v1266
  %v1268 = vpop.f32.mrf.mxu0
  %1269 = vmatprep.mubr.bf16.mxu0 %v441
  %1270 = vmatmul.mubr.bf16.gmra.mxu0 %v440
  %v1271 = vpop.f32.mrf.mxu0
  %v1272 = vadd.f32 %v1175, %v1271
  %v1273 = vpop.f32.mrf.mxu0
  %v1274 = vpop.f32.mrf.mxu0
  %v1275 = vadd.f32 %v1178, %v1274
  %v1276 = vpop.f32.mrf.mxu0
  %1277 = vmatprep.mubr.bf16.mxu0 %v449
  %1278 = vmatmul.mubr.bf16.gmra.mxu0 %v448
  %v1279 = vpop.f32.mrf.mxu0
  %v1280 = vadd.f32 %v1183, %v1279
  %v1281 = vpop.f32.mrf.mxu0
  %v1282 = vpop.f32.mrf.mxu0
  %v1283 = vadd.f32 %v1186, %v1282
  %v1284 = vpop.f32.mrf.mxu0
  %1285 = vmatprep.mubr.bf16.mxu0 %v457
  %1286 = vmatmul.mubr.bf16.gmra.mxu0 %v456
  %v1287 = vpop.f32.mrf.mxu0
  %v1288 = vadd.f32 %v1191, %v1287
  %v1289 = vpop.f32.mrf.mxu0
  %v1290 = vpop.f32.mrf.mxu0
  %v1291 = vadd.f32 %v1194, %v1290
  %v1292 = vpop.f32.mrf.mxu0
  %1293 = vmatprep.mubr.bf16.mxu0 %v465
  %1294 = vmatmul.mubr.bf16.gmra.mxu0 %v464
  %v1295 = vpop.f32.mrf.mxu0
  %v1296 = vadd.f32 %v1199, %v1295
  %v1297 = vpop.f32.mrf.mxu0
  %v1298 = vpop.f32.mrf.mxu0
  %v1299 = vadd.f32 %v1202, %v1298
  %v1300 = vpop.f32.mrf.mxu0
  %1301 = vmatprep.mubr.bf16.mxu0 %v473
  %1302 = vmatmul.mubr.bf16.gmra.mxu0 %v472
  %v1303 = vpop.f32.mrf.mxu0
  %v1304 = vadd.f32 %v1207, %v1303
  %v1305 = vpop.f32.mrf.mxu0
  %v1306 = vpop.f32.mrf.mxu0
  %v1307 = vadd.f32 %v1210, %v1306
  %v1308 = vpop.f32.mrf.mxu0
  %1309 = vmatprep.mubr.bf16.mxu0 %v481
  %1310 = vmatmul.mubr.bf16.gmra.mxu0 %v480
  %v1311 = vpop.f32.mrf.mxu0
  %v1312 = vadd.f32 %v1215, %v1311
  %v1313 = vpop.f32.mrf.mxu0
  %v1314 = vpop.f32.mrf.mxu0
  %v1315 = vadd.f32 %v1218, %v1314
  %v1316 = vpop.f32.mrf.mxu0
  %1317 = vdwg.mxu0
  %v1318 = vmax.f32 %v1256, 0.0
  %v1319 = vmax.f32 %v1259, 0.0
  %v1320 = vmax.f32 %v1264, 0.0
  %v1321 = vmax.f32 %v1267, 0.0
  %v1322 = vmax.f32 %v1272, 0.0
  %v1323 = vmax.f32 %v1275, 0.0
  %v1324 = vmax.f32 %v1280, 0.0
  %v1325 = vmax.f32 %v1283, 0.0
  %v1326 = vmax.f32 %v1288, 0.0
  %v1327 = vmax.f32 %v1291, 0.0
  %v1328 = vmax.f32 %v1296, 0.0
  %v1329 = vmax.f32 %v1299, 0.0
  %v1330 = vmax.f32 %v1304, 0.0
  %v1331 = vmax.f32 %v1307, 0.0
  %v1332 = vmax.f32 %v1312, 0.0
  %v1333 = vmax.f32 %v1315, 0.0
  %v1334 = vpack.c.bf16 %v1319, %v1318
  %v1335 = vpack.c.bf16 %v1321, %v1320
  %v1336 = vpack.c.bf16 %v1323, %v1322
  %v1337 = vpack.c.bf16 %v1325, %v1324
  %v1338 = vpack.c.bf16 %v1327, %v1326
  %v1339 = vpack.c.bf16 %v1329, %v1328
  %v1340 = vpack.c.bf16 %v1331, %v1330
  %v1341 = vpack.c.bf16 %v1333, %v1332
  %v1342 = vld [vmem:[%s3] sm:$0xf]
  %v1343 = vld [vmem:[%s3 + $0x4] sm:$0xf]
  %v1344 = vld [vmem:[%s3 + $0x8] sm:$0xf]
  %v1345 = vld [vmem:[%s3 + $0xc] sm:$0xf]
  %v1346 = vld [vmem:[%s3 + $0x10] sm:$0xf]
  %v1347 = vld [vmem:[%s3 + $0x14] sm:$0xf]
  %v1348 = vld [vmem:[%s3 + $0x18] sm:$0xf]
  %v1349 = vld [vmem:[%s3 + $0x1c] sm:$0xf]
  %v1350 = vld [vmem:[%s3 + $0x20] sm:$0xf]
  %v1351 = vld [vmem:[%s3 + $0x24] sm:$0xf]
  %v1352 = vld [vmem:[%s3 + $0x28] sm:$0xf]
  %v1353 = vld [vmem:[%s3 + $0x2c] sm:$0xf]
  %v1354 = vld [vmem:[%s3 + $0x30] sm:$0xf]
  %v1355 = vld [vmem:[%s3 + $0x34] sm:$0xf]
  %v1356 = vld [vmem:[%s3 + $0x38] sm:$0xf]
  %v1357 = vld [vmem:[%s3 + $0x3c] sm:$0xf]
  %v1358 = vld [vmem:[%s4] sm:$0x1]
  %v1360 = vlaneseq
  %v1361 = vshrl.u32 %v1360, 7
  %v1362 = vsub.s32 0, %v1361
  %v1363 = vrot.slane %v1358, %v1362
  %v1381 = vunpack.c.l.b16 %v1342
  %v1382 = vunpack.c.l.b16 %v1343
  %v1383 = vunpack.c.l.b16 %v1344
  %v1384 = vunpack.c.l.b16 %v1345
  %v1385 = vunpack.c.l.b16 %v1346
  %v1386 = vunpack.c.l.b16 %v1347
  %v1387 = vunpack.c.l.b16 %v1348
  %v1388 = vunpack.c.l.b16 %v1349
  %v1389 = vunpack.c.l.b16 %v1350
  %v1390 = vunpack.c.l.b16 %v1351
  %v1391 = vunpack.c.l.b16 %v1352
  %v1392 = vunpack.c.l.b16 %v1353
  %v1393 = vunpack.c.l.b16 %v1354
  %v1394 = vunpack.c.l.b16 %v1355
  %v1395 = vunpack.c.l.b16 %v1356
  %v1396 = vunpack.c.l.b16 %v1357
  %v1397 = vpack.c.b16 %v1382, %v1381
  %v1398 = vpack.c.b16 %v1384, %v1383
  %v1399 = vpack.c.b16 %v1386, %v1385
  %v1400 = vpack.c.b16 %v1388, %v1387
  %v1401 = vpack.c.b16 %v1390, %v1389
  %v1402 = vpack.c.b16 %v1392, %v1391
  %v1403 = vpack.c.b16 %v1394, %v1393
  %v1404 = vpack.c.b16 %v1396, %v1395
  %1413 = vmatprep.subr.bf16.mxu0 0
  %1414 = vmatpush1.bf16.msra.mxu0 %v1404
  %1415 = vmatprep.subr.bf16.mxu0 0
  %1416 = vmatpush1.bf16.msra.mxu0 %v1403
  %1417 = vmatprep.subr.bf16.mxu0 0
  %1418 = vmatpush1.bf16.msra.mxu0 %v1402
  %1419 = vmatprep.subr.bf16.mxu0 0
  %1420 = vmatpush1.bf16.msra.mxu0 %v1401
  %1421 = vmatprep.subr.bf16.mxu0 0
  %1422 = vmatpush1.bf16.msra.mxu0 %v1400
  %1423 = vmatprep.subr.bf16.mxu0 0
  %1424 = vmatpush1.bf16.msra.mxu0 %v1399
  %1425 = vmatprep.subr.bf16.mxu0 0
  %1426 = vmatpush1.bf16.msra.mxu0 %v1398
  %1427 = vmatprep.subr.bf16.mxu0 0
  %1428 = vmatpush1.bf16.msra.mxu0 %v1397
  %1429 = vmatprep.subr.bf16.mxu0 0
  %1430 = vmatpush2.bf16.msra.mxu0 0
  %1431 = vmatprep.subr.bf16.mxu0 0
  %1432 = vmatpush2.bf16.msra.mxu0 0
  %1433 = vmatprep.subr.bf16.mxu0 0
  %1434 = vmatpush2.bf16.msra.mxu0 0
  %1435 = vmatprep.subr.bf16.mxu0 0
  %1436 = vmatpush2.bf16.msra.mxu0 0
  %1437 = vmatprep.subr.bf16.mxu0 0
  %1438 = vmatpush2.bf16.msra.mxu0 0
  %1439 = vmatprep.subr.bf16.mxu0 0
  %1440 = vmatpush2.bf16.msra.mxu0 0
  %1441 = vmatprep.subr.bf16.mxu0 0
  %1442 = vmatpush2.bf16.msra.mxu0 0
  %1443 = vmatprep.subr.bf16.mxu0 0
  %1444 = vmatpush2.bf16.msra.mxu0 0
  %1445 = vmatprep.mubr.bf16.mxu0 0
  %1446 = vmatmul.mubr.bf16.gmra.mxu0 %v1334
  %v1447 = vpop.f32.mrf.mxu0
  %v1448 = vadd.f32 %v1363, %v1447
  %v1449 = vpop.f32.mrf.mxu0
  %v1450 = vpop.f32.mrf.mxu0
  %v1451 = vadd.f32 %v1363, %v1450
  %v1452 = vpop.f32.mrf.mxu0
  %1453 = vmatprep.mubr.bf16.mxu0 0
  %1454 = vmatmul.mubr.bf16.gmra.mxu0 %v1335
  %v1455 = vpop.f32.mrf.mxu0
  %v1456 = vadd.f32 %v1363, %v1455
  %v1457 = vpop.f32.mrf.mxu0
  %v1458 = vpop.f32.mrf.mxu0
  %v1459 = vadd.f32 %v1363, %v1458
  %v1460 = vpop.f32.mrf.mxu0
  %1461 = vmatprep.mubr.bf16.mxu0 0
  %1462 = vmatmul.mubr.bf16.gmra.mxu0 %v1336
  %v1463 = vpop.f32.mrf.mxu0
  %v1464 = vadd.f32 %v1363, %v1463
  %v1465 = vpop.f32.mrf.mxu0
  %v1466 = vpop.f32.mrf.mxu0
  %v1467 = vadd.f32 %v1363, %v1466
  %v1468 = vpop.f32.mrf.mxu0
  %1469 = vmatprep.mubr.bf16.mxu0 0
  %1470 = vmatmul.mubr.bf16.gmra.mxu0 %v1337
  %v1471 = vpop.f32.mrf.mxu0
  %v1472 = vadd.f32 %v1363, %v1471
  %v1473 = vpop.f32.mrf.mxu0
  %v1474 = vpop.f32.mrf.mxu0
  %v1475 = vadd.f32 %v1363, %v1474
  %v1476 = vpop.f32.mrf.mxu0
  %1477 = vmatprep.mubr.bf16.mxu0 0
  %1478 = vmatmul.mubr.bf16.gmra.mxu0 %v1338
  %v1479 = vpop.f32.mrf.mxu0
  %v1480 = vadd.f32 %v1363, %v1479
  %v1481 = vpop.f32.mrf.mxu0
  %v1482 = vpop.f32.mrf.mxu0
  %v1483 = vadd.f32 %v1363, %v1482
  %v1484 = vpop.f32.mrf.mxu0
  %1485 = vmatprep.mubr.bf16.mxu0 0
  %1486 = vmatmul.mubr.bf16.gmra.mxu0 %v1339
  %v1487 = vpop.f32.mrf.mxu0
  %v1488 = vadd.f32 %v1363, %v1487
  %v1489 = vpop.f32.mrf.mxu0
  %v1490 = vpop.f32.mrf.mxu0
  %v1491 = vadd.f32 %v1363, %v1490
  %v1492 = vpop.f32.mrf.mxu0
  %1493 = vmatprep.mubr.bf16.mxu0 0
  %1494 = vmatmul.mubr.bf16.gmra.mxu0 %v1340
  %v1495 = vpop.f32.mrf.mxu0
  %v1496 = vadd.f32 %v1363, %v1495
  %v1497 = vpop.f32.mrf.mxu0
  %v1498 = vpop.f32.mrf.mxu0
  %v1499 = vadd.f32 %v1363, %v1498
  %v1500 = vpop.f32.mrf.mxu0
  %1501 = vmatprep.mubr.bf16.mxu0 0
  %1502 = vmatmul.mubr.bf16.gmra.mxu0 %v1341
  %v1503 = vpop.f32.mrf.mxu0
  %v1504 = vadd.f32 %v1363, %v1503
  %v1505 = vpop.f32.mrf.mxu0
  %v1506 = vpop.f32.mrf.mxu0
  %v1507 = vadd.f32 %v1363, %v1506
  %v1508 = vpop.f32.mrf.mxu0
  %1509 = vdwg.mxu0
  %v1510 = vmax.f32 %v1448, 0.0
  %v1511 = vmax.f32 %v1451, 0.0
  %v1512 = vmax.f32 %v1456, 0.0
  %v1513 = vmax.f32 %v1459, 0.0
  %v1514 = vmax.f32 %v1464, 0.0
  %v1515 = vmax.f32 %v1467, 0.0
  %v1516 = vmax.f32 %v1472, 0.0
  %v1517 = vmax.f32 %v1475, 0.0
  %v1518 = vmax.f32 %v1480, 0.0
  %v1519 = vmax.f32 %v1483, 0.0
  %v1520 = vmax.f32 %v1488, 0.0
  %v1521 = vmax.f32 %v1491, 0.0
  %v1522 = vmax.f32 %v1496, 0.0
  %v1523 = vmax.f32 %v1499, 0.0
  %v1524 = vmax.f32 %v1504, 0.0
  %v1525 = vmax.f32 %v1507, 0.0
  %v1526 = vpack.c.bf16 %v1511, %v1510
  %v1527 = vpack.c.bf16 %v1513, %v1512
  %v1528 = vpack.c.bf16 %v1515, %v1514
  %v1529 = vpack.c.bf16 %v1517, %v1516
  %v1530 = vpack.c.bf16 %v1519, %v1518
  %v1531 = vpack.c.bf16 %v1521, %v1520
  %v1532 = vpack.c.bf16 %v1523, %v1522
  %v1533 = vpack.c.bf16 %v1525, %v1524
  %v1534 = vld [vmem:[%s5] sm:$0xf]
  %v1535 = vld [vmem:[%s5 + $0x4] sm:$0xf]
  %v1536 = vld [vmem:[%s5 + $0x8] sm:$0xf]
  %v1537 = vld [vmem:[%s5 + $0xc] sm:$0xf]
  %v1538 = vld [vmem:[%s5 + $0x10] sm:$0xf]
  %v1539 = vld [vmem:[%s5 + $0x14] sm:$0xf]
  %v1540 = vld [vmem:[%s5 + $0x18] sm:$0xf]
  %v1541 = vld [vmem:[%s5 + $0x1c] sm:$0xf]
  %v1542 = vld [vmem:[%s5 + $0x20] sm:$0xf]
  %v1543 = vld [vmem:[%s5 + $0x24] sm:$0xf]
  %v1544 = vld [vmem:[%s5 + $0x28] sm:$0xf]
  %v1545 = vld [vmem:[%s5 + $0x2c] sm:$0xf]
  %v1546 = vld [vmem:[%s5 + $0x30] sm:$0xf]
  %v1547 = vld [vmem:[%s5 + $0x34] sm:$0xf]
  %v1548 = vld [vmem:[%s5 + $0x38] sm:$0xf]
  %v1549 = vld [vmem:[%s5 + $0x3c] sm:$0xf]
  %v1550 = vld [vmem:[%s6] sm:$0x1]
  %v1552 = vlaneseq
  %v1553 = vshrl.u32 %v1552, 7
  %v1554 = vsub.s32 0, %v1553
  %v1555 = vrot.slane %v1550, %v1554
  %v1573 = vunpack.c.l.b16 %v1534
  %v1574 = vunpack.c.l.b16 %v1535
  %v1575 = vunpack.c.l.b16 %v1536
  %v1576 = vunpack.c.l.b16 %v1537
  %v1577 = vunpack.c.l.b16 %v1538
  %v1578 = vunpack.c.l.b16 %v1539
  %v1579 = vunpack.c.l.b16 %v1540
  %v1580 = vunpack.c.l.b16 %v1541
  %v1581 = vunpack.c.l.b16 %v1542
  %v1582 = vunpack.c.l.b16 %v1543
  %v1583 = vunpack.c.l.b16 %v1544
  %v1584 = vunpack.c.l.b16 %v1545
  %v1585 = vunpack.c.l.b16 %v1546
  %v1586 = vunpack.c.l.b16 %v1547
  %v1587 = vunpack.c.l.b16 %v1548
  %v1588 = vunpack.c.l.b16 %v1549
  %v1589 = vpack.c.b16 %v1574, %v1573
  %v1590 = vpack.c.b16 %v1576, %v1575
  %v1591 = vpack.c.b16 %v1578, %v1577
  %v1592 = vpack.c.b16 %v1580, %v1579
  %v1593 = vpack.c.b16 %v1582, %v1581
  %v1594 = vpack.c.b16 %v1584, %v1583
  %v1595 = vpack.c.b16 %v1586, %v1585
  %v1596 = vpack.c.b16 %v1588, %v1587
  %1605 = vmatprep.subr.bf16.mxu0 0
  %1606 = vmatpush1.bf16.msra.mxu0 %v1596
  %1607 = vmatprep.subr.bf16.mxu0 0
  %1608 = vmatpush1.bf16.msra.mxu0 %v1595
  %1609 = vmatprep.subr.bf16.mxu0 0
  %1610 = vmatpush1.bf16.msra.mxu0 %v1594
  %1611 = vmatprep.subr.bf16.mxu0 0
  %1612 = vmatpush1.bf16.msra.mxu0 %v1593
  %1613 = vmatprep.subr.bf16.mxu0 0
  %1614 = vmatpush1.bf16.msra.mxu0 %v1592
  %1615 = vmatprep.subr.bf16.mxu0 0
  %1616 = vmatpush1.bf16.msra.mxu0 %v1591
  %1617 = vmatprep.subr.bf16.mxu0 0
  %1618 = vmatpush1.bf16.msra.mxu0 %v1590
  %1619 = vmatprep.subr.bf16.mxu0 0
  %1620 = vmatpush1.bf16.msra.mxu0 %v1589
  %1621 = vmatprep.subr.bf16.mxu0 0
  %1622 = vmatpush2.bf16.msra.mxu0 0
  %1623 = vmatprep.subr.bf16.mxu0 0
  %1624 = vmatpush2.bf16.msra.mxu0 0
  %1625 = vmatprep.subr.bf16.mxu0 0
  %1626 = vmatpush2.bf16.msra.mxu0 0
  %1627 = vmatprep.subr.bf16.mxu0 0
  %1628 = vmatpush2.bf16.msra.mxu0 0
  %1629 = vmatprep.subr.bf16.mxu0 0
  %1630 = vmatpush2.bf16.msra.mxu0 0
  %1631 = vmatprep.subr.bf16.mxu0 0
  %1632 = vmatpush2.bf16.msra.mxu0 0
  %1633 = vmatprep.subr.bf16.mxu0 0
  %1634 = vmatpush2.bf16.msra.mxu0 0
  %1635 = vmatprep.subr.bf16.mxu0 0
  %1636 = vmatpush2.bf16.msra.mxu0 0
  %1637 = vmatprep.mubr.bf16.mxu0 0
  %1638 = vmatmul.mubr.bf16.gmra.mxu0 %v1526
  %v1639 = vpop.f32.mrf.mxu0
  %v1640 = vadd.f32 %v1555, %v1639
  %v1641 = vpop.f32.mrf.mxu0
  %v1642 = vpop.f32.mrf.mxu0
  %v1643 = vadd.f32 %v1555, %v1642
  %v1644 = vpop.f32.mrf.mxu0
  %1645 = vmatprep.mubr.bf16.mxu0 0
  %1646 = vmatmul.mubr.bf16.gmra.mxu0 %v1527
  %v1647 = vpop.f32.mrf.mxu0
  %v1648 = vadd.f32 %v1555, %v1647
  %v1649 = vpop.f32.mrf.mxu0
  %v1650 = vpop.f32.mrf.mxu0
  %v1651 = vadd.f32 %v1555, %v1650
  %v1652 = vpop.f32.mrf.mxu0
  %1653 = vmatprep.mubr.bf16.mxu0 0
  %1654 = vmatmul.mubr.bf16.gmra.mxu0 %v1528
  %v1655 = vpop.f32.mrf.mxu0
  %v1656 = vadd.f32 %v1555, %v1655
  %v1657 = vpop.f32.mrf.mxu0
  %v1658 = vpop.f32.mrf.mxu0
  %v1659 = vadd.f32 %v1555, %v1658
  %v1660 = vpop.f32.mrf.mxu0
  %1661 = vmatprep.mubr.bf16.mxu0 0
  %1662 = vmatmul.mubr.bf16.gmra.mxu0 %v1529
  %v1663 = vpop.f32.mrf.mxu0
  %v1664 = vadd.f32 %v1555, %v1663
  %v1665 = vpop.f32.mrf.mxu0
  %v1666 = vpop.f32.mrf.mxu0
  %v1667 = vadd.f32 %v1555, %v1666
  %v1668 = vpop.f32.mrf.mxu0
  %1669 = vmatprep.mubr.bf16.mxu0 0
  %1670 = vmatmul.mubr.bf16.gmra.mxu0 %v1530
  %v1671 = vpop.f32.mrf.mxu0
  %v1672 = vadd.f32 %v1555, %v1671
  %v1673 = vpop.f32.mrf.mxu0
  %v1674 = vpop.f32.mrf.mxu0
  %v1675 = vadd.f32 %v1555, %v1674
  %v1676 = vpop.f32.mrf.mxu0
  %1677 = vmatprep.mubr.bf16.mxu0 0
  %1678 = vmatmul.mubr.bf16.gmra.mxu0 %v1531
  %v1679 = vpop.f32.mrf.mxu0
  %v1680 = vadd.f32 %v1555, %v1679
  %v1681 = vpop.f32.mrf.mxu0
  %v1682 = vpop.f32.mrf.mxu0
  %v1683 = vadd.f32 %v1555, %v1682
  %v1684 = vpop.f32.mrf.mxu0
  %1685 = vmatprep.mubr.bf16.mxu0 0
  %1686 = vmatmul.mubr.bf16.gmra.mxu0 %v1532
  %v1687 = vpop.f32.mrf.mxu0
  %v1688 = vadd.f32 %v1555, %v1687
  %v1689 = vpop.f32.mrf.mxu0
  %v1690 = vpop.f32.mrf.mxu0
  %v1691 = vadd.f32 %v1555, %v1690
  %v1692 = vpop.f32.mrf.mxu0
  %1693 = vmatprep.mubr.bf16.mxu0 0
  %1694 = vmatmul.mubr.bf16.gmra.mxu0 %v1533
  %v1695 = vpop.f32.mrf.mxu0
  %v1696 = vadd.f32 %v1555, %v1695
  %v1697 = vpop.f32.mrf.mxu0
  %v1698 = vpop.f32.mrf.mxu0
  %v1699 = vadd.f32 %v1555, %v1698
  %v1700 = vpop.f32.mrf.mxu0
  %1701 = vdwg.mxu0
  %1702 = vst [vmem:[%s7] sm:$0xff] %v1640
  %1703 = vst [vmem:[%s7 + $0x8] sm:$0xff] %v1643
  %1704 = vst [vmem:[%s7 + $0x10] sm:$0xff] %v1648
  %1705 = vst [vmem:[%s7 + $0x18] sm:$0xff] %v1651
  %1706 = vst [vmem:[%s7 + $0x20] sm:$0xff] %v1656
  %1707 = vst [vmem:[%s7 + $0x28] sm:$0xff] %v1659
  %1708 = vst [vmem:[%s7 + $0x30] sm:$0xff] %v1664
  %1709 = vst [vmem:[%s7 + $0x38] sm:$0xff] %v1667
  %1710 = vst [vmem:[%s7 + $0x40] sm:$0xff] %v1672
  %1711 = vst [vmem:[%s7 + $0x48] sm:$0xff] %v1675
  %1712 = vst [vmem:[%s7 + $0x50] sm:$0xff] %v1680
  %1713 = vst [vmem:[%s7 + $0x58] sm:$0xff] %v1683
  %1714 = vst [vmem:[%s7 + $0x60] sm:$0xff] %v1688
  %1715 = vst [vmem:[%s7 + $0x68] sm:$0xff] %v1691
  %1716 = vst [vmem:[%s7 + $0x70] sm:$0xff] %v1696
  %1717 = vst [vmem:[%s7 + $0x78] sm:$0xff] %v1699
  // Predicated region
  $region30: #{continual_model_forward.1} parent=0 // pred_check
    _
  $region31: #{continual_model_forward.1} parent=0 // pred_check_branch
    %1719 = sbr.rel (0) target = $region33
  $region32: #{continual_model_forward.1} parent=0 // pred_region
    _
  $region33: #{continual_model_forward.1} parent=0 // pred_fallthru
    _
  // Predicated region
  $region34: #{continual_model_forward.1} parent=0 // pred_check
    _
  $region35: #{continual_model_forward.1} parent=0 // pred_check_branch
    %1721 = sbr.rel (0) target = $region37
  $region36: #{continual_model_forward.1} parent=0 // pred_region
    _
  $region37: #{continual_model_forward.1} parent=0 // pred_fallthru
    _

</llo_original>
